<compile_context>
chip_gen: v6e
topology: v6e:2x2x1
jax: 0.10.0
libtpu: 0.0.40
codegen_flags: <defaults>
</compile_context>

<pallas_src>
import math

import jax
import jax.numpy as jnp
import numpy as np
from jax.experimental import pallas as pl
from jax.experimental.pallas import tpu as pltpu  # noqa: F401  (TPU backend import)

# ----------------------------- config (small, consistent with the module) -----------------------------
VOCAB_SIZE = 128
HIDDEN_SIZE = 64
N_SUB_HYPERNETWORK = 1
CHUNK_SIZE = 32
QNN_DEPTH = 2

OUT_DIM_MPS = 32
HIDDEN_SIZES = [32, 64, 128, 128, 64, 32]

WEIGHT_LENGTH = int(math.ceil(VOCAB_SIZE * HIDDEN_SIZE / N_SUB_HYPERNETWORK))   # 8192
BATCH_SIZE = int(math.ceil(WEIGHT_LENGTH / CHUNK_SIZE))                          # 256
N_QUBIT = int(math.ceil(math.log2(BATCH_SIZE)))                                  # 8

GAMMA, BETA, ALPHA = 0.1, 0.6, 0.15


# ----------------------------- Pallas kernel: fused MappingModel + fc1 -----------------------------
def _hyper_mlp_kernel(*refs):
    # refs = (x_ref, w0, b0, w1, b1, ..., w7, b7, o_ref)
    #   x_ref : (M, n_qubit+1)                 combined qubit-state / probability features
    #   w_i   : (in_i, out_i)                  pre-transposed linear weights (lane-dense output dim)
    #   b_i   : (1, out_i)                     biases, lane-major
    #   o_ref : (M, chunk_size)                hypernetwork output chunk per batch row
    # Single invocation, everything resident in VMEM; intermediates never leave VMEM.
    x_ref, o_ref = refs[0], refs[-1]
    wb = refs[1:-1]
    h = x_ref[...]
    for i in range(0, len(wb), 2):
        w = wb[i][...]
        b = wb[i + 1][...]
        h = jnp.dot(h, w, preferred_element_type=jnp.float32) + b
    o_ref[...] = h.astype(o_ref.dtype)


def hyper_mlp(x, weights, biases):
    """Fused 8-layer linear chain (MappingModel + dropout(p=0) + fc1).

    x: (M, D_in) f32.  weights[i]: (out_i, in_i) PyTorch nn.Linear layout.  biases[i]: (out_i,).
    Returns (M, out_last) f32.
    """
    M = x.shape[0]
    out_dim = weights[-1].shape[0]
    args = [x]
    for w, b in zip(weights, biases):
        args.append(w.T)                # pre-transpose once in the wrapper -> kernel does plain h @ W
        args.append(b.reshape(1, -1))   # (1, out): lane-major bias row
    return pl.pallas_call(
        _hyper_mlp_kernel,
        out_shape=jax.ShapeDtypeStruct((M, out_dim), jnp.float32),
        # No grid / no BlockSpecs: single kernel invocation, whole arrays mapped into VMEM
        # (total working set ~0.3 MiB << VMEM on v5e/v6e/v7x).
    )(*args)


# ----------------------------- QLayer: statevector simulation (plain JAX glue) -----------------------------
def _apply_ry(state, wire, theta):
    c = jnp.cos(theta * 0.5)
    s = jnp.sin(theta * 0.5)
    st = jnp.moveaxis(state, wire, 0)
    s0, s1 = st[0], st[1]
    st = jnp.stack([c * s0 - s * s1, s * s0 + c * s1], axis=0)
    return jnp.moveaxis(st, 0, wire)


def _apply_cnot(state, ctrl, tgt):
    st = jnp.moveaxis(state, (ctrl, tgt), (0, 1))
    st = jnp.stack([st[0], st[1, ::-1]], axis=0)      # flip target bit where control == 1
    return jnp.moveaxis(st, (0, 1), (ctrl, tgt))


def qlayer_forward(ry_params):
    """QLayer.forward: q_depth x (RY on every wire, CNOT chain), then post-processing.

    ry_params: (q_depth, n_qubit) rotation angles.  Returns (2**n_qubit,) f32.
    RY/CNOT have real matrix entries, so the state stays real-valued.
    """
    n = ry_params.shape[1]
    state = jnp.zeros((2,) * n, jnp.float32).at[(0,) * n].set(1.0)     # |0...0>
    for k in range(ry_params.shape[0]):
        for w in range(n):
            state = _apply_ry(state, w, ry_params[k, w])
        for w in range(n - 1):
            state = _apply_cnot(state, w, w + 1)
    probs = state.reshape(-1) ** 2                                      # |amplitude|^2
    easy_scale_coeff = 2.0 ** (n - 1)
    x = (BETA * jnp.tanh(GAMMA * easy_scale_coeff * probs)) ** ALPHA
    return x - jnp.mean(x)


def generate_qubit_states(key, n_qubit, num_vectors):
    """+-1 bit patterns (LSB-first) of `num_vectors` distinct random basis indices."""
    idx = jax.random.permutation(key, 2 ** n_qubit)[:num_vectors]
    bits = (idx[:, None] >> jnp.arange(n_qubit)[None, :]) & 1
    return bits.astype(jnp.float32) * 2.0 - 1.0                         # (num_vectors, n_qubit)


# ----------------------------- QT_HyperNet forward -----------------------------
def qt_hypernet_forward(params, states_key):
    # 1) quantum circuit -> post-processed probabilities, take the first batch_size entries
    probs = qlayer_forward(params["ry_theta"])[:BATCH_SIZE].reshape(BATCH_SIZE, 1)
    # 2) random +-1 qubit-state patterns; the original [:weight_length] slice is a no-op here
    qubit_states = generate_qubit_states(states_key, N_QUBIT, BATCH_SIZE)
    combined = jnp.concatenate([qubit_states, probs], axis=1)           # (batch, n_qubit + 1)
    # 3) MappingModel + dropout(p=0) + fc1 -- fused Pallas kernel (checkpoint is a forward no-op)
    out = hyper_mlp(combined, params["w"], params["b"])                 # (batch, chunk_size)
    # 4) flatten, keep weight_length entries, subtract the mean
    flat = out.reshape(-1)[:WEIGHT_LENGTH]
    return flat - jnp.mean(flat)


def hyper_mlp_ref(x, weights, biases):
    """Pure-JAX reference for the fused kernel."""
    h = x
    for w, b in zip(weights, biases):
        h = jnp.dot(h, w.T) + b
    return h


# ----------------------------- deterministic parameter init -----------------------------
def init_params(key):
    dims = [N_QUBIT + 1] + HIDDEN_SIZES + [OUT_DIM_MPS, CHUNK_SIZE]     # 8 linear layers total
    layer_io = list(zip(dims[:-1], dims[1:]))
    keys = jax.random.split(key, 2 * len(layer_io) + 1)
    params = {
        "ry_theta": jax.random.uniform(keys[0], (QNN_DEPTH, N_QUBIT), jnp.float32,
                                       minval=-math.pi, maxval=math.pi),
        "w": [],
        "b": [],
    }
    for i, (din, dout) in enumerate(layer_io):
        bound = 1.0 / math.sqrt(din)                                    # nn.Linear default init scale
        params["w"].append(jax.random.uniform(keys[2 * i + 1], (dout, din), jnp.float32,
                                              minval=-bound, maxval=bound))
        params["b"].append(jax.random.uniform(keys[2 * i + 2], (dout,), jnp.float32,
                                              minval=-bound, maxval=bound))
    return params


# ----------------------------- main -----------------------------
if __name__ == "__main__":
    key = jax.random.PRNGKey(0)
    kp, ks = jax.random.split(key)
    params = init_params(kp)

    fwd = jax.jit(qt_hypernet_forward)
    out = fwd(params, ks)
    jax.block_until_ready(out)
    assert out.shape == (WEIGHT_LENGTH,)

    # Sanity check: Pallas fused-MLP path vs pure-JAX reference on identical inputs.
    probs = qlayer_forward(params["ry_theta"])[:BATCH_SIZE].reshape(BATCH_SIZE, 1)
    qubit_states = generate_qubit_states(ks, N_QUBIT, BATCH_SIZE)
    combined = jnp.concatenate([qubit_states, probs], axis=1)
    ref = hyper_mlp_ref(combined, params["w"], params["b"]).reshape(-1)[:WEIGHT_LENGTH]
    ref = ref - jnp.mean(ref)
    # Tolerance leaves headroom for MXU f32-pass vs XLA default matmul precision differences;
    # structural bugs (wrong transpose / missing bias / layer order) produce O(1) relative error.
    np.testing.assert_allclose(np.asarray(out), np.asarray(ref), rtol=2e-2, atol=1e-4)

    print("KERNEL_OK")
</pallas_src>

<mosaic_0001>
module attributes {stable_mosaic.version = 11 : i64} {
  func.func @_hyper_mlp_kernel(%arg0: memref<256x9xf32, #tpu.memory_space<vmem>>, %arg1: memref<9x32xf32, #tpu.memory_space<vmem>>, %arg2: memref<1x32xf32, #tpu.memory_space<vmem>>, %arg3: memref<32x64xf32, #tpu.memory_space<vmem>>, %arg4: memref<1x64xf32, #tpu.memory_space<vmem>>, %arg5: memref<64x128xf32, #tpu.memory_space<vmem>>, %arg6: memref<1x128xf32, #tpu.memory_space<vmem>>, %arg7: memref<128x128xf32, #tpu.memory_space<vmem>>, %arg8: memref<1x128xf32, #tpu.memory_space<vmem>>, %arg9: memref<128x64xf32, #tpu.memory_space<vmem>>, %arg10: memref<1x64xf32, #tpu.memory_space<vmem>>, %arg11: memref<64x32xf32, #tpu.memory_space<vmem>>, %arg12: memref<1x32xf32, #tpu.memory_space<vmem>>, %arg13: memref<32x32xf32, #tpu.memory_space<vmem>>, %arg14: memref<1x32xf32, #tpu.memory_space<vmem>>, %arg15: memref<32x32xf32, #tpu.memory_space<vmem>>, %arg16: memref<1x32xf32, #tpu.memory_space<vmem>>, %arg17: memref<256x32xf32, #tpu.memory_space<vmem>>) attributes {dimension_semantics = [], scalar_prefetch = 0 : i64, scratch_operands = 0 : i64, tpu.core_type = #tpu.core_type<tc>} {
    %c0 = arith.constant 0 : index
    %c0_0 = arith.constant 0 : index
    %0 = vector.load %arg0[%c0, %c0_0] : memref<256x9xf32, #tpu.memory_space<vmem>>, vector<256x9xf32>
    %c0_1 = arith.constant 0 : index
    %c0_2 = arith.constant 0 : index
    %1 = vector.load %arg1[%c0_1, %c0_2] : memref<9x32xf32, #tpu.memory_space<vmem>>, vector<9x32xf32>
    %c0_3 = arith.constant 0 : index
    %c0_4 = arith.constant 0 : index
    %2 = vector.load %arg2[%c0_3, %c0_4] : memref<1x32xf32, #tpu.memory_space<vmem>>, vector<1x32xf32>
    %cst = arith.constant dense<0.000000e+00> : vector<256x32xf32>
    %3 = tpu.matmul %0, %1, %cst {dimension_numbers = #tpu.dot_dimension_numbers<[1], [0], [0], [1], [0, 0, 1, 1], [], []>} : vector<256x9xf32>, vector<9x32xf32>, vector<256x32xf32> -> vector<256x32xf32>
    %4 = vector.broadcast %2 : vector<1x32xf32> to vector<256x32xf32>
    %5 = arith.addf %3, %4 : vector<256x32xf32>
    %c0_5 = arith.constant 0 : index
    %c0_6 = arith.constant 0 : index
    %6 = vector.load %arg3[%c0_5, %c0_6] : memref<32x64xf32, #tpu.memory_space<vmem>>, vector<32x64xf32>
    %c0_7 = arith.constant 0 : index
    %c0_8 = arith.constant 0 : index
    %7 = vector.load %arg4[%c0_7, %c0_8] : memref<1x64xf32, #tpu.memory_space<vmem>>, vector<1x64xf32>
    %cst_9 = arith.constant dense<0.000000e+00> : vector<256x64xf32>
    %8 = tpu.matmul %5, %6, %cst_9 {dimension_numbers = #tpu.dot_dimension_numbers<[1], [0], [0], [1], [0, 0, 1, 1], [], []>} : vector<256x32xf32>, vector<32x64xf32>, vector<256x64xf32> -> vector<256x64xf32>
    %9 = vector.broadcast %7 : vector<1x64xf32> to vector<256x64xf32>
    %10 = arith.addf %8, %9 : vector<256x64xf32>
    %c0_10 = arith.constant 0 : index
    %c0_11 = arith.constant 0 : index
    %11 = vector.load %arg5[%c0_10, %c0_11] : memref<64x128xf32, #tpu.memory_space<vmem>>, vector<64x128xf32>
    %c0_12 = arith.constant 0 : index
    %c0_13 = arith.constant 0 : index
    %12 = vector.load %arg6[%c0_12, %c0_13] : memref<1x128xf32, #tpu.memory_space<vmem>>, vector<1x128xf32>
    %cst_14 = arith.constant dense<0.000000e+00> : vector<256x128xf32>
    %13 = tpu.matmul %10, %11, %cst_14 {dimension_numbers = #tpu.dot_dimension_numbers<[1], [0], [0], [1], [0, 0, 1, 1], [], []>} : vector<256x64xf32>, vector<64x128xf32>, vector<256x128xf32> -> vector<256x128xf32>
    %14 = vector.broadcast %12 : vector<1x128xf32> to vector<256x128xf32>
    %15 = arith.addf %13, %14 : vector<256x128xf32>
    %c0_15 = arith.constant 0 : index
    %c0_16 = arith.constant 0 : index
    %16 = vector.load %arg7[%c0_15, %c0_16] : memref<128x128xf32, #tpu.memory_space<vmem>>, vector<128x128xf32>
    %c0_17 = arith.constant 0 : index
    %c0_18 = arith.constant 0 : index
    %17 = vector.load %arg8[%c0_17, %c0_18] : memref<1x128xf32, #tpu.memory_space<vmem>>, vector<1x128xf32>
    %cst_19 = arith.constant dense<0.000000e+00> : vector<256x128xf32>
    %18 = tpu.matmul %15, %16, %cst_19 {dimension_numbers = #tpu.dot_dimension_numbers<[1], [0], [0], [1], [0, 0, 1, 1], [], []>} : vector<256x128xf32>, vector<128x128xf32>, vector<256x128xf32> -> vector<256x128xf32>
    %19 = vector.broadcast %17 : vector<1x128xf32> to vector<256x128xf32>
    %20 = arith.addf %18, %19 : vector<256x128xf32>
    %c0_20 = arith.constant 0 : index
    %c0_21 = arith.constant 0 : index
    %21 = vector.load %arg9[%c0_20, %c0_21] : memref<128x64xf32, #tpu.memory_space<vmem>>, vector<128x64xf32>
    %c0_22 = arith.constant 0 : index
    %c0_23 = arith.constant 0 : index
    %22 = vector.load %arg10[%c0_22, %c0_23] : memref<1x64xf32, #tpu.memory_space<vmem>>, vector<1x64xf32>
    %cst_24 = arith.constant dense<0.000000e+00> : vector<256x64xf32>
    %23 = tpu.matmul %20, %21, %cst_24 {dimension_numbers = #tpu.dot_dimension_numbers<[1], [0], [0], [1], [0, 0, 1, 1], [], []>} : vector<256x128xf32>, vector<128x64xf32>, vector<256x64xf32> -> vector<256x64xf32>
    %24 = vector.broadcast %22 : vector<1x64xf32> to vector<256x64xf32>
    %25 = arith.addf %23, %24 : vector<256x64xf32>
    %c0_25 = arith.constant 0 : index
    %c0_26 = arith.constant 0 : index
    %26 = vector.load %arg11[%c0_25, %c0_26] : memref<64x32xf32, #tpu.memory_space<vmem>>, vector<64x32xf32>
    %c0_27 = arith.constant 0 : index
    %c0_28 = arith.constant 0 : index
    %27 = vector.load %arg12[%c0_27, %c0_28] : memref<1x32xf32, #tpu.memory_space<vmem>>, vector<1x32xf32>
    %cst_29 = arith.constant dense<0.000000e+00> : vector<256x32xf32>
    %28 = tpu.matmul %25, %26, %cst_29 {dimension_numbers = #tpu.dot_dimension_numbers<[1], [0], [0], [1], [0, 0, 1, 1], [], []>} : vector<256x64xf32>, vector<64x32xf32>, vector<256x32xf32> -> vector<256x32xf32>
    %29 = vector.broadcast %27 : vector<1x32xf32> to vector<256x32xf32>
    %30 = arith.addf %28, %29 : vector<256x32xf32>
    %c0_30 = arith.constant 0 : index
    %c0_31 = arith.constant 0 : index
    %31 = vector.load %arg13[%c0_30, %c0_31] : memref<32x32xf32, #tpu.memory_space<vmem>>, vector<32x32xf32>
    %c0_32 = arith.constant 0 : index
    %c0_33 = arith.constant 0 : index
    %32 = vector.load %arg14[%c0_32, %c0_33] : memref<1x32xf32, #tpu.memory_space<vmem>>, vector<1x32xf32>
    %cst_34 = arith.constant dense<0.000000e+00> : vector<256x32xf32>
    %33 = tpu.matmul %30, %31, %cst_34 {dimension_numbers = #tpu.dot_dimension_numbers<[1], [0], [0], [1], [0, 0, 1, 1], [], []>} : vector<256x32xf32>, vector<32x32xf32>, vector<256x32xf32> -> vector<256x32xf32>
    %34 = vector.broadcast %32 : vector<1x32xf32> to vector<256x32xf32>
    %35 = arith.addf %33, %34 : vector<256x32xf32>
    %c0_35 = arith.constant 0 : index
    %c0_36 = arith.constant 0 : index
    %36 = vector.load %arg15[%c0_35, %c0_36] : memref<32x32xf32, #tpu.memory_space<vmem>>, vector<32x32xf32>
    %c0_37 = arith.constant 0 : index
    %c0_38 = arith.constant 0 : index
    %37 = vector.load %arg16[%c0_37, %c0_38] : memref<1x32xf32, #tpu.memory_space<vmem>>, vector<1x32xf32>
    %cst_39 = arith.constant dense<0.000000e+00> : vector<256x32xf32>
    %38 = tpu.matmul %35, %36, %cst_39 {dimension_numbers = #tpu.dot_dimension_numbers<[1], [0], [0], [1], [0, 0, 1, 1], [], []>} : vector<256x32xf32>, vector<32x32xf32>, vector<256x32xf32> -> vector<256x32xf32>
    %39 = vector.broadcast %37 : vector<1x32xf32> to vector<256x32xf32>
    %40 = arith.addf %38, %39 : vector<256x32xf32>
    %c0_40 = arith.constant 0 : index
    %c0_41 = arith.constant 0 : index
    %41 = vector.load %arg17[%c0_40, %c0_41] : memref<256x32xf32, #tpu.memory_space<vmem>>, vector<256x32xf32>
    tpu.vector_store %arg17[%c0_40, %c0_41], %40 {strides = array<i32>} : memref<256x32xf32, #tpu.memory_space<vmem>>, vector<256x32xf32>,
    return
  }
}

</mosaic_0001>

<llo_original>
// kernel: qt_hypernet_forward.1
$region0: #{qt_hypernet_forward.1}
  #allocation0 [shape = 'u32[]', space=smem, size = 0x4, offset = 0x4, fixed_abs, tag = 'smem constant byte address 0x4 - core index']
  #allocation1 [shape = 'u32[144,128]{1,0:T(1,128)}', space=vmem, size = 0x12000, scoped, tag = 'internal scratch']
  %s0 = inlined_call_operand.vmem [shape: f32[256,9], index: 0, kind: input, shape index: {}]
  %s1 = inlined_call_operand.vmem [shape: f32[9,32], index: 1, kind: input, shape index: {}]
  %s2 = inlined_call_operand.vmem [shape: f32[1,32], index: 2, kind: input, shape index: {}]
  %s3 = inlined_call_operand.vmem [shape: f32[32,64], index: 3, kind: input, shape index: {}]
  %s4 = inlined_call_operand.vmem [shape: f32[1,64], index: 4, kind: input, shape index: {}]
  %s5 = inlined_call_operand.vmem [shape: f32[64,128], index: 5, kind: input, shape index: {}]
  %s6 = inlined_call_operand.vmem [shape: f32[1,128], index: 6, kind: input, shape index: {}]
  %s7 = inlined_call_operand.vmem [shape: f32[128,128], index: 7, kind: input, shape index: {}]
  %s8 = inlined_call_operand.vmem [shape: f32[1,128], index: 8, kind: input, shape index: {}]
  %s9 = inlined_call_operand.vmem [shape: f32[128,64], index: 9, kind: input, shape index: {}]
  %s10 = inlined_call_operand.vmem [shape: f32[1,64], index: 10, kind: input, shape index: {}]
  %s11 = inlined_call_operand.vmem [shape: f32[64,32], index: 11, kind: input, shape index: {}]
  %s12 = inlined_call_operand.vmem [shape: f32[1,32], index: 12, kind: input, shape index: {}]
  %s13 = inlined_call_operand.vmem [shape: f32[32,32], index: 13, kind: input, shape index: {}]
  %s14 = inlined_call_operand.vmem [shape: f32[1,32], index: 14, kind: input, shape index: {}]
  %s15 = inlined_call_operand.vmem [shape: f32[32,32], index: 15, kind: input, shape index: {}]
  %s16 = inlined_call_operand.vmem [shape: f32[1,32], index: 16, kind: input, shape index: {}]
  %s17 = inlined_call_operand.vmem [shape: f32[256,32], index: 17, kind: output, shape index: {}]
  %s18 = sld [smem:[#allocation0]]
  $region78: #{qt_hypernet_forward.1} parent=0
    _
  %s20 = ssub.s32 1, %s18
  %s21 = scalar_select 0, %s20, %s18
  // Predicated region
  $region2: #{qt_hypernet_forward.1} parent=0 // pred_check
    _
  $region3: #{qt_hypernet_forward.1} parent=0 // pred_check_branch
    %23 = sbr.rel (0) target = $region5
  $region4: #{qt_hypernet_forward.1} parent=0 // pred_region
    _
  $region5: #{qt_hypernet_forward.1} parent=0 // pred_fallthru
    _
  // Predicated region
  $region6: #{qt_hypernet_forward.1} parent=0 // pred_check
    _
  $region7: #{qt_hypernet_forward.1} parent=0 // pred_check_branch
    %25 = sbr.rel (0) target = $region9
  $region8: #{qt_hypernet_forward.1} parent=0 // pred_region
    _
  $region9: #{qt_hypernet_forward.1} parent=0 // pred_fallthru
    _
  // Predicated region
  $region10: #{qt_hypernet_forward.1} parent=0 // pred_check
    _
  $region11: #{qt_hypernet_forward.1} parent=0 // pred_check_branch
    %27 = sbr.rel (0) target = $region13
  $region12: #{qt_hypernet_forward.1} parent=0 // pred_region
    _
  $region13: #{qt_hypernet_forward.1} parent=0 // pred_fallthru
    _
  // Predicated region
  $region14: #{qt_hypernet_forward.1} parent=0 // pred_check
    _
  $region15: #{qt_hypernet_forward.1} parent=0 // pred_check_branch
    %29 = sbr.rel (0) target = $region17
  $region16: #{qt_hypernet_forward.1} parent=0 // pred_region
    _
  $region17: #{qt_hypernet_forward.1} parent=0 // pred_fallthru
    _
  // Predicated region
  $region18: #{qt_hypernet_forward.1} parent=0 // pred_check
    _
  $region19: #{qt_hypernet_forward.1} parent=0 // pred_check_branch
    %31 = sbr.rel (0) target = $region21
  $region20: #{qt_hypernet_forward.1} parent=0 // pred_region
    _
  $region21: #{qt_hypernet_forward.1} parent=0 // pred_fallthru
    _
  // Predicated region
  $region22: #{qt_hypernet_forward.1} parent=0 // pred_check
    _
  $region23: #{qt_hypernet_forward.1} parent=0 // pred_check_branch
    %33 = sbr.rel (0) target = $region25
  $region24: #{qt_hypernet_forward.1} parent=0 // pred_region
    _
  $region25: #{qt_hypernet_forward.1} parent=0 // pred_fallthru
    _
  // Predicated region
  $region26: #{qt_hypernet_forward.1} parent=0 // pred_check
    _
  $region27: #{qt_hypernet_forward.1} parent=0 // pred_check_branch
    %35 = sbr.rel (0) target = $region29
  $region28: #{qt_hypernet_forward.1} parent=0 // pred_region
    _
  $region29: #{qt_hypernet_forward.1} parent=0 // pred_fallthru
    _
  // Predicated region
  $region30: #{qt_hypernet_forward.1} parent=0 // pred_check
    _
  $region31: #{qt_hypernet_forward.1} parent=0 // pred_check_branch
    %37 = sbr.rel (0) target = $region33
  $region32: #{qt_hypernet_forward.1} parent=0 // pred_region
    _
  $region33: #{qt_hypernet_forward.1} parent=0 // pred_fallthru
    _
  // Predicated region
  $region34: #{qt_hypernet_forward.1} parent=0 // pred_check
    _
  $region35: #{qt_hypernet_forward.1} parent=0 // pred_check_branch
    %39 = sbr.rel (0) target = $region37
  $region36: #{qt_hypernet_forward.1} parent=0 // pred_region
    _
  $region37: #{qt_hypernet_forward.1} parent=0 // pred_fallthru
    _
  // Predicated region
  $region38: #{qt_hypernet_forward.1} parent=0 // pred_check
    _
  $region39: #{qt_hypernet_forward.1} parent=0 // pred_check_branch
    %41 = sbr.rel (0) target = $region41
  $region40: #{qt_hypernet_forward.1} parent=0 // pred_region
    _
  $region41: #{qt_hypernet_forward.1} parent=0 // pred_fallthru
    _
  // Predicated region
  $region42: #{qt_hypernet_forward.1} parent=0 // pred_check
    _
  $region43: #{qt_hypernet_forward.1} parent=0 // pred_check_branch
    %43 = sbr.rel (0) target = $region45
  $region44: #{qt_hypernet_forward.1} parent=0 // pred_region
    _
  $region45: #{qt_hypernet_forward.1} parent=0 // pred_fallthru
    _
  // Predicated region
  $region46: #{qt_hypernet_forward.1} parent=0 // pred_check
    _
  $region47: #{qt_hypernet_forward.1} parent=0 // pred_check_branch
    %45 = sbr.rel (0) target = $region49
  $region48: #{qt_hypernet_forward.1} parent=0 // pred_region
    _
  $region49: #{qt_hypernet_forward.1} parent=0 // pred_fallthru
    _
  // Predicated region
  $region50: #{qt_hypernet_forward.1} parent=0 // pred_check
    _
  $region51: #{qt_hypernet_forward.1} parent=0 // pred_check_branch
    %47 = sbr.rel (0) target = $region53
  $region52: #{qt_hypernet_forward.1} parent=0 // pred_region
    _
  $region53: #{qt_hypernet_forward.1} parent=0 // pred_fallthru
    _
  // Predicated region
  $region54: #{qt_hypernet_forward.1} parent=0 // pred_check
    _
  $region55: #{qt_hypernet_forward.1} parent=0 // pred_check_branch
    %49 = sbr.rel (0) target = $region57
  $region56: #{qt_hypernet_forward.1} parent=0 // pred_region
    _
  $region57: #{qt_hypernet_forward.1} parent=0 // pred_fallthru
    _
  // Predicated region
  $region58: #{qt_hypernet_forward.1} parent=0 // pred_check
    _
  $region59: #{qt_hypernet_forward.1} parent=0 // pred_check_branch
    %51 = sbr.rel (0) target = $region61
  $region60: #{qt_hypernet_forward.1} parent=0 // pred_region
    _
  $region61: #{qt_hypernet_forward.1} parent=0 // pred_fallthru
    _
  // Predicated region
  $region62: #{qt_hypernet_forward.1} parent=0 // pred_check
    _
  $region63: #{qt_hypernet_forward.1} parent=0 // pred_check_branch
    %53 = sbr.rel (0) target = $region65
  $region64: #{qt_hypernet_forward.1} parent=0 // pred_region
    _
  $region65: #{qt_hypernet_forward.1} parent=0 // pred_fallthru
    _
  // Predicated region
  $region66: #{qt_hypernet_forward.1} parent=0 // pred_check
    _
  $region67: #{qt_hypernet_forward.1} parent=0 // pred_check_branch
    %55 = sbr.rel (0) target = $region69
  $region68: #{qt_hypernet_forward.1} parent=0 // pred_region
    _
  $region69: #{qt_hypernet_forward.1} parent=0 // pred_fallthru
    _
  %v56 = vld [vmem:[%s0] sm:$0xff]
  %v57 = vld [vmem:[%s0 + $0x8] sm:$0xff]
  %v58 = vld [vmem:[%s0 + $0x10] sm:$0xff]
  %v59 = vld [vmem:[%s0 + $0x18] sm:$0xff]
  %v60 = vld [vmem:[%s0 + $0x20] sm:$0xff]
  %v61 = vld [vmem:[%s0 + $0x28] sm:$0xff]
  %v62 = vld [vmem:[%s0 + $0x30] sm:$0xff]
  %v63 = vld [vmem:[%s0 + $0x38] sm:$0xff]
  %v64 = vld [vmem:[%s0 + $0x40] sm:$0xff]
  %v65 = vld [vmem:[%s0 + $0x48] sm:$0xff]
  %v66 = vld [vmem:[%s0 + $0x50] sm:$0xff]
  %v67 = vld [vmem:[%s0 + $0x58] sm:$0xff]
  %v68 = vld [vmem:[%s0 + $0x60] sm:$0xff]
  %v69 = vld [vmem:[%s0 + $0x68] sm:$0xff]
  %v70 = vld [vmem:[%s0 + $0x70] sm:$0xff]
  %v71 = vld [vmem:[%s0 + $0x78] sm:$0xff]
  %v72 = vld [vmem:[%s0 + $0x80] sm:$0xff]
  %v73 = vld [vmem:[%s0 + $0x88] sm:$0xff]
  %v74 = vld [vmem:[%s0 + $0x90] sm:$0xff]
  %v75 = vld [vmem:[%s0 + $0x98] sm:$0xff]
  %v76 = vld [vmem:[%s0 + $0xa0] sm:$0xff]
  %v77 = vld [vmem:[%s0 + $0xa8] sm:$0xff]
  %v78 = vld [vmem:[%s0 + $0xb0] sm:$0xff]
  %v79 = vld [vmem:[%s0 + $0xb8] sm:$0xff]
  %v80 = vld [vmem:[%s0 + $0xc0] sm:$0xff]
  %v81 = vld [vmem:[%s0 + $0xc8] sm:$0xff]
  %v82 = vld [vmem:[%s0 + $0xd0] sm:$0xff]
  %v83 = vld [vmem:[%s0 + $0xd8] sm:$0xff]
  %v84 = vld [vmem:[%s0 + $0xe0] sm:$0xff]
  %v85 = vld [vmem:[%s0 + $0xe8] sm:$0xff]
  %v86 = vld [vmem:[%s0 + $0xf0] sm:$0xff]
  %v87 = vld [vmem:[%s0 + $0xf8] sm:$0xff]
  %v88 = vld [vmem:[%s1] sm:$0xff]
  %v89 = vld [vmem:[%s1 + $0x8] sm:$0x1]
  %v90 = vld [vmem:[%s2] sm:$0x1]
  %v92 = vlaneseq
  %v93 = vshrl.u32 %v92, 7
  %v94 = vsub.s32 0, %v93
  %v95 = vrot.slane %v90, %v94
  %vm97 = vcmask 72704
  %v99 = vsel %vm97, %v56, 0
  %v102 = vsel %vm97, %v57, 0
  %v105 = vsel %vm97, %v58, 0
  %v108 = vsel %vm97, %v59, 0
  %v111 = vsel %vm97, %v60, 0
  %v114 = vsel %vm97, %v61, 0
  %v117 = vsel %vm97, %v62, 0
  %v120 = vsel %vm97, %v63, 0
  %v123 = vsel %vm97, %v64, 0
  %v126 = vsel %vm97, %v65, 0
  %v129 = vsel %vm97, %v66, 0
  %v132 = vsel %vm97, %v67, 0
  %v135 = vsel %vm97, %v68, 0
  %v138 = vsel %vm97, %v69, 0
  %v141 = vsel %vm97, %v70, 0
  %v144 = vsel %vm97, %v71, 0
  %v147 = vsel %vm97, %v72, 0
  %v150 = vsel %vm97, %v73, 0
  %v153 = vsel %vm97, %v74, 0
  %v156 = vsel %vm97, %v75, 0
  %v159 = vsel %vm97, %v76, 0
  %v162 = vsel %vm97, %v77, 0
  %v165 = vsel %vm97, %v78, 0
  %v168 = vsel %vm97, %v79, 0
  %v171 = vsel %vm97, %v80, 0
  %v174 = vsel %vm97, %v81, 0
  %v177 = vsel %vm97, %v82, 0
  %v180 = vsel %vm97, %v83, 0
  %v183 = vsel %vm97, %v84, 0
  %v186 = vsel %vm97, %v85, 0
  %v189 = vsel %vm97, %v86, 0
  %v192 = vsel %vm97, %v87, 0
  %vm194 = vcmask 1040384
  %v196 = vsel %vm194, %v89, 0
  %198 = vmatprep.subr.mxu0 0.0
  %199 = vmatpush1.msra.mxu0 0.0
  %200 = vmatprep.subr.mxu0 0.0
  %201 = vmatpush1.msra.mxu0 0.0
  %202 = vmatprep.subr.mxu0 0.0
  %203 = vmatpush1.msra.mxu0 0.0
  %204 = vmatprep.subr.mxu0 0.0
  %205 = vmatpush1.msra.mxu0 0.0
  %206 = vmatprep.subr.mxu0 0.0
  %207 = vmatpush1.msra.mxu0 0.0
  %208 = vmatprep.subr.mxu0 0.0
  %209 = vmatpush1.msra.mxu0 0.0
  %210 = vmatprep.subr.mxu0 0.0
  %211 = vmatpush1.msra.mxu0 0.0
  %212 = vmatprep.subr.mxu0 0.0
  %213 = vmatpush1.msra.mxu0 0.0
  %214 = vmatprep.subr.mxu0 0.0
  %215 = vmatpush1.msra.mxu0 0.0
  %216 = vmatprep.subr.mxu0 0.0
  %217 = vmatpush1.msra.mxu0 0.0
  %218 = vmatprep.subr.mxu0 0.0
  %219 = vmatpush1.msra.mxu0 0.0
  %220 = vmatprep.subr.mxu0 0.0
  %221 = vmatpush1.msra.mxu0 0.0
  %222 = vmatprep.subr.mxu0 0.0
  %223 = vmatpush1.msra.mxu0 0.0
  %224 = vmatprep.subr.mxu0 0.0
  %225 = vmatpush1.msra.mxu0 0.0
  %226 = vmatprep.subr.mxu0 0.0
  %227 = vmatpush1.msra.mxu0 %v196
  %228 = vmatprep.subr.mxu0 0.0
  %229 = vmatpush1.msra.mxu0 %v88
  %230 = vmatprep.subr.mxu0 0.0
  %231 = vmatpush2.msra.mxu0 0.0
  %232 = vmatprep.subr.mxu0 0.0
  %233 = vmatpush2.msra.mxu0 0.0
  %234 = vmatprep.subr.mxu0 0.0
  %235 = vmatpush2.msra.mxu0 0.0
  %236 = vmatprep.subr.mxu0 0.0
  %237 = vmatpush2.msra.mxu0 0.0
  %238 = vmatprep.subr.mxu0 0.0
  %239 = vmatpush2.msra.mxu0 0.0
  %240 = vmatprep.subr.mxu0 0.0
  %241 = vmatpush2.msra.mxu0 0.0
  %242 = vmatprep.subr.mxu0 0.0
  %243 = vmatpush2.msra.mxu0 0.0
  %244 = vmatprep.subr.mxu0 0.0
  %245 = vmatpush2.msra.mxu0 0.0
  %246 = vmatprep.subr.mxu0 0.0
  %247 = vmatpush2.msra.mxu0 0.0
  %248 = vmatprep.subr.mxu0 0.0
  %249 = vmatpush2.msra.mxu0 0.0
  %250 = vmatprep.subr.mxu0 0.0
  %251 = vmatpush2.msra.mxu0 0.0
  %252 = vmatprep.subr.mxu0 0.0
  %253 = vmatpush2.msra.mxu0 0.0
  %254 = vmatprep.subr.mxu0 0.0
  %255 = vmatpush2.msra.mxu0 0.0
  %256 = vmatprep.subr.mxu0 0.0
  %257 = vmatpush2.msra.mxu0 0.0
  %258 = vmatprep.subr.mxu0 0.0
  %259 = vmatpush2.msra.mxu0 0.0
  %260 = vmatprep.subr.mxu0 0.0
  %261 = vmatpush2.msra.mxu0 0.0
  %262 = vmatprep.mubr.f32.mxu0 0.0
  %263 = vmatmul.mubr.f32.gmra.mxu0 %v99
  %v264 = vpop.f32.mrf.mxu0
  %v265 = vadd.f32 %v95, %v264
  %v266 = vpop.f32.mrf.mxu0
  %267 = vmatprep.mubr.f32.mxu0 0.0
  %268 = vmatmul.mubr.f32.gmra.mxu0 %v102
  %v269 = vpop.f32.mrf.mxu0
  %v270 = vadd.f32 %v95, %v269
  %v271 = vpop.f32.mrf.mxu0
  %272 = vmatprep.mubr.f32.mxu0 0.0
  %273 = vmatmul.mubr.f32.gmra.mxu0 %v105
  %v274 = vpop.f32.mrf.mxu0
  %v275 = vadd.f32 %v95, %v274
  %v276 = vpop.f32.mrf.mxu0
  %277 = vmatprep.mubr.f32.mxu0 0.0
  %278 = vmatmul.mubr.f32.gmra.mxu0 %v108
  %v279 = vpop.f32.mrf.mxu0
  %v280 = vadd.f32 %v95, %v279
  %v281 = vpop.f32.mrf.mxu0
  %282 = vmatprep.mubr.f32.mxu0 0.0
  %283 = vmatmul.mubr.f32.gmra.mxu0 %v111
  %v284 = vpop.f32.mrf.mxu0
  %v285 = vadd.f32 %v95, %v284
  %v286 = vpop.f32.mrf.mxu0
  %287 = vmatprep.mubr.f32.mxu0 0.0
  %288 = vmatmul.mubr.f32.gmra.mxu0 %v114
  %v289 = vpop.f32.mrf.mxu0
  %v290 = vadd.f32 %v95, %v289
  %v291 = vpop.f32.mrf.mxu0
  %292 = vmatprep.mubr.f32.mxu0 0.0
  %293 = vmatmul.mubr.f32.gmra.mxu0 %v117
  %v294 = vpop.f32.mrf.mxu0
  %v295 = vadd.f32 %v95, %v294
  %v296 = vpop.f32.mrf.mxu0
  %297 = vmatprep.mubr.f32.mxu0 0.0
  %298 = vmatmul.mubr.f32.gmra.mxu0 %v120
  %v299 = vpop.f32.mrf.mxu0
  %v300 = vadd.f32 %v95, %v299
  %v301 = vpop.f32.mrf.mxu0
  %302 = vmatprep.mubr.f32.mxu0 0.0
  %303 = vmatmul.mubr.f32.gmra.mxu0 %v123
  %v304 = vpop.f32.mrf.mxu0
  %v305 = vadd.f32 %v95, %v304
  %v306 = vpop.f32.mrf.mxu0
  %307 = vmatprep.mubr.f32.mxu0 0.0
  %308 = vmatmul.mubr.f32.gmra.mxu0 %v126
  %v309 = vpop.f32.mrf.mxu0
  %v310 = vadd.f32 %v95, %v309
  %v311 = vpop.f32.mrf.mxu0
  %312 = vmatprep.mubr.f32.mxu0 0.0
  %313 = vmatmul.mubr.f32.gmra.mxu0 %v129
  %v314 = vpop.f32.mrf.mxu0
  %v315 = vadd.f32 %v95, %v314
  %v316 = vpop.f32.mrf.mxu0
  %317 = vmatprep.mubr.f32.mxu0 0.0
  %318 = vmatmul.mubr.f32.gmra.mxu0 %v132
  %v319 = vpop.f32.mrf.mxu0
  %v320 = vadd.f32 %v95, %v319
  %v321 = vpop.f32.mrf.mxu0
  %322 = vmatprep.mubr.f32.mxu0 0.0
  %323 = vmatmul.mubr.f32.gmra.mxu0 %v135
  %v324 = vpop.f32.mrf.mxu0
  %v325 = vadd.f32 %v95, %v324
  %v326 = vpop.f32.mrf.mxu0
  %327 = vmatprep.mubr.f32.mxu0 0.0
  %328 = vmatmul.mubr.f32.gmra.mxu0 %v138
  %v329 = vpop.f32.mrf.mxu0
  %v330 = vadd.f32 %v95, %v329
  %v331 = vpop.f32.mrf.mxu0
  %332 = vmatprep.mubr.f32.mxu0 0.0
  %333 = vmatmul.mubr.f32.gmra.mxu0 %v141
  %v334 = vpop.f32.mrf.mxu0
  %v335 = vadd.f32 %v95, %v334
  %v336 = vpop.f32.mrf.mxu0
  %337 = vmatprep.mubr.f32.mxu0 0.0
  %338 = vmatmul.mubr.f32.gmra.mxu0 %v144
  %v339 = vpop.f32.mrf.mxu0
  %v340 = vadd.f32 %v95, %v339
  %v341 = vpop.f32.mrf.mxu0
  %342 = vmatprep.mubr.f32.mxu0 0.0
  %343 = vmatmul.mubr.f32.gmra.mxu0 %v147
  %v344 = vpop.f32.mrf.mxu0
  %v345 = vadd.f32 %v95, %v344
  %v346 = vpop.f32.mrf.mxu0
  %347 = vmatprep.mubr.f32.mxu0 0.0
  %348 = vmatmul.mubr.f32.gmra.mxu0 %v150
  %v349 = vpop.f32.mrf.mxu0
  %v350 = vadd.f32 %v95, %v349
  %v351 = vpop.f32.mrf.mxu0
  %352 = vmatprep.mubr.f32.mxu0 0.0
  %353 = vmatmul.mubr.f32.gmra.mxu0 %v153
  %v354 = vpop.f32.mrf.mxu0
  %v355 = vadd.f32 %v95, %v354
  %v356 = vpop.f32.mrf.mxu0
  %357 = vmatprep.mubr.f32.mxu0 0.0
  %358 = vmatmul.mubr.f32.gmra.mxu0 %v156
  %v359 = vpop.f32.mrf.mxu0
  %v360 = vadd.f32 %v95, %v359
  %v361 = vpop.f32.mrf.mxu0
  %362 = vmatprep.mubr.f32.mxu0 0.0
  %363 = vmatmul.mubr.f32.gmra.mxu0 %v159
  %v364 = vpop.f32.mrf.mxu0
  %v365 = vadd.f32 %v95, %v364
  %v366 = vpop.f32.mrf.mxu0
  %367 = vmatprep.mubr.f32.mxu0 0.0
  %368 = vmatmul.mubr.f32.gmra.mxu0 %v162
  %v369 = vpop.f32.mrf.mxu0
  %v370 = vadd.f32 %v95, %v369
  %v371 = vpop.f32.mrf.mxu0
  %372 = vmatprep.mubr.f32.mxu0 0.0
  %373 = vmatmul.mubr.f32.gmra.mxu0 %v165
  %v374 = vpop.f32.mrf.mxu0
  %v375 = vadd.f32 %v95, %v374
  %v376 = vpop.f32.mrf.mxu0
  %377 = vmatprep.mubr.f32.mxu0 0.0
  %378 = vmatmul.mubr.f32.gmra.mxu0 %v168
  %v379 = vpop.f32.mrf.mxu0
  %v380 = vadd.f32 %v95, %v379
  %v381 = vpop.f32.mrf.mxu0
  %382 = vmatprep.mubr.f32.mxu0 0.0
  %383 = vmatmul.mubr.f32.gmra.mxu0 %v171
  %v384 = vpop.f32.mrf.mxu0
  %v385 = vadd.f32 %v95, %v384
  %v386 = vpop.f32.mrf.mxu0
  %387 = vmatprep.mubr.f32.mxu0 0.0
  %388 = vmatmul.mubr.f32.gmra.mxu0 %v174
  %v389 = vpop.f32.mrf.mxu0
  %v390 = vadd.f32 %v95, %v389
  %v391 = vpop.f32.mrf.mxu0
  %392 = vmatprep.mubr.f32.mxu0 0.0
  %393 = vmatmul.mubr.f32.gmra.mxu0 %v177
  %v394 = vpop.f32.mrf.mxu0
  %v395 = vadd.f32 %v95, %v394
  %v396 = vpop.f32.mrf.mxu0
  %397 = vmatprep.mubr.f32.mxu0 0.0
  %398 = vmatmul.mubr.f32.gmra.mxu0 %v180
  %v399 = vpop.f32.mrf.mxu0
  %v400 = vadd.f32 %v95, %v399
  %v401 = vpop.f32.mrf.mxu0
  %402 = vmatprep.mubr.f32.mxu0 0.0
  %403 = vmatmul.mubr.f32.gmra.mxu0 %v183
  %v404 = vpop.f32.mrf.mxu0
  %v405 = vadd.f32 %v95, %v404
  %v406 = vpop.f32.mrf.mxu0
  %407 = vmatprep.mubr.f32.mxu0 0.0
  %408 = vmatmul.mubr.f32.gmra.mxu0 %v186
  %v409 = vpop.f32.mrf.mxu0
  %v410 = vadd.f32 %v95, %v409
  %v411 = vpop.f32.mrf.mxu0
  %412 = vmatprep.mubr.f32.mxu0 0.0
  %413 = vmatmul.mubr.f32.gmra.mxu0 %v189
  %v414 = vpop.f32.mrf.mxu0
  %v415 = vadd.f32 %v95, %v414
  %v416 = vpop.f32.mrf.mxu0
  %417 = vmatprep.mubr.f32.mxu0 0.0
  %418 = vmatmul.mubr.f32.gmra.mxu0 %v192
  %v419 = vpop.f32.mrf.mxu0
  %v420 = vadd.f32 %v95, %v419
  %v421 = vpop.f32.mrf.mxu0
  %422 = vdwg.mxu0
  %v423 = vld [vmem:[%s3] sm:$0xff]
  %v424 = vld [vmem:[%s3 + $0x8] sm:$0xff]
  %v425 = vld [vmem:[%s3 + $0x10] sm:$0xff]
  %v426 = vld [vmem:[%s3 + $0x18] sm:$0xff]
  %v427 = vld [vmem:[%s4] sm:$0x1]
  %v429 = vlaneseq
  %v430 = vshrl.u32 %v429, 7
  %v431 = vsub.s32 0, %v430
  %v432 = vrot.slane %v427, %v431
  %vm434 = vcmask 261120
  %v436 = vsel %vm434, %v265, 0
  %v439 = vsel %vm434, %v270, 0
  %v442 = vsel %vm434, %v275, 0
  %v445 = vsel %vm434, %v280, 0
  %v448 = vsel %vm434, %v285, 0
  %v451 = vsel %vm434, %v290, 0
  %v454 = vsel %vm434, %v295, 0
  %v457 = vsel %vm434, %v300, 0
  %v460 = vsel %vm434, %v305, 0
  %v463 = vsel %vm434, %v310, 0
  %v466 = vsel %vm434, %v315, 0
  %v469 = vsel %vm434, %v320, 0
  %v472 = vsel %vm434, %v325, 0
  %v475 = vsel %vm434, %v330, 0
  %v478 = vsel %vm434, %v335, 0
  %v481 = vsel %vm434, %v340, 0
  %v484 = vsel %vm434, %v345, 0
  %v487 = vsel %vm434, %v350, 0
  %v490 = vsel %vm434, %v355, 0
  %v493 = vsel %vm434, %v360, 0
  %v496 = vsel %vm434, %v365, 0
  %v499 = vsel %vm434, %v370, 0
  %v502 = vsel %vm434, %v375, 0
  %v505 = vsel %vm434, %v380, 0
  %v508 = vsel %vm434, %v385, 0
  %v511 = vsel %vm434, %v390, 0
  %v514 = vsel %vm434, %v395, 0
  %v517 = vsel %vm434, %v400, 0
  %v520 = vsel %vm434, %v405, 0
  %v523 = vsel %vm434, %v410, 0
  %v526 = vsel %vm434, %v415, 0
  %v529 = vsel %vm434, %v420, 0
  %531 = vmatprep.subr.mxu0 0.0
  %532 = vmatpush1.msra.mxu0 0.0
  %533 = vmatprep.subr.mxu0 0.0
  %534 = vmatpush1.msra.mxu0 0.0
  %535 = vmatprep.subr.mxu0 0.0
  %536 = vmatpush1.msra.mxu0 0.0
  %537 = vmatprep.subr.mxu0 0.0
  %538 = vmatpush1.msra.mxu0 0.0
  %539 = vmatprep.subr.mxu0 0.0
  %540 = vmatpush1.msra.mxu0 0.0
  %541 = vmatprep.subr.mxu0 0.0
  %542 = vmatpush1.msra.mxu0 0.0
  %543 = vmatprep.subr.mxu0 0.0
  %544 = vmatpush1.msra.mxu0 0.0
  %545 = vmatprep.subr.mxu0 0.0
  %546 = vmatpush1.msra.mxu0 0.0
  %547 = vmatprep.subr.mxu0 0.0
  %548 = vmatpush1.msra.mxu0 0.0
  %549 = vmatprep.subr.mxu0 0.0
  %550 = vmatpush1.msra.mxu0 0.0
  %551 = vmatprep.subr.mxu0 0.0
  %552 = vmatpush1.msra.mxu0 0.0
  %553 = vmatprep.subr.mxu0 0.0
  %554 = vmatpush1.msra.mxu0 0.0
  %555 = vmatprep.subr.mxu0 0.0
  %556 = vmatpush1.msra.mxu0 %v426
  %557 = vmatprep.subr.mxu0 0.0
  %558 = vmatpush1.msra.mxu0 %v425
  %559 = vmatprep.subr.mxu0 0.0
  %560 = vmatpush1.msra.mxu0 %v424
  %561 = vmatprep.subr.mxu0 0.0
  %562 = vmatpush1.msra.mxu0 %v423
  %563 = vmatprep.subr.mxu0 0.0
  %564 = vmatpush2.msra.mxu0 0.0
  %565 = vmatprep.subr.mxu0 0.0
  %566 = vmatpush2.msra.mxu0 0.0
  %567 = vmatprep.subr.mxu0 0.0
  %568 = vmatpush2.msra.mxu0 0.0
  %569 = vmatprep.subr.mxu0 0.0
  %570 = vmatpush2.msra.mxu0 0.0
  %571 = vmatprep.subr.mxu0 0.0
  %572 = vmatpush2.msra.mxu0 0.0
  %573 = vmatprep.subr.mxu0 0.0
  %574 = vmatpush2.msra.mxu0 0.0
  %575 = vmatprep.subr.mxu0 0.0
  %576 = vmatpush2.msra.mxu0 0.0
  %577 = vmatprep.subr.mxu0 0.0
  %578 = vmatpush2.msra.mxu0 0.0
  %579 = vmatprep.subr.mxu0 0.0
  %580 = vmatpush2.msra.mxu0 0.0
  %581 = vmatprep.subr.mxu0 0.0
  %582 = vmatpush2.msra.mxu0 0.0
  %583 = vmatprep.subr.mxu0 0.0
  %584 = vmatpush2.msra.mxu0 0.0
  %585 = vmatprep.subr.mxu0 0.0
  %586 = vmatpush2.msra.mxu0 0.0
  %587 = vmatprep.subr.mxu0 0.0
  %588 = vmatpush2.msra.mxu0 0.0
  %589 = vmatprep.subr.mxu0 0.0
  %590 = vmatpush2.msra.mxu0 0.0
  %591 = vmatprep.subr.mxu0 0.0
  %592 = vmatpush2.msra.mxu0 0.0
  %593 = vmatprep.subr.mxu0 0.0
  %594 = vmatpush2.msra.mxu0 0.0
  %595 = vmatprep.mubr.f32.mxu0 0.0
  %596 = vmatmul.mubr.f32.gmra.mxu0 %v436
  %v597 = vpop.f32.mrf.mxu0
  %v598 = vadd.f32 %v432, %v597
  %v599 = vpop.f32.mrf.mxu0
  %600 = vmatprep.mubr.f32.mxu0 0.0
  %601 = vmatmul.mubr.f32.gmra.mxu0 %v439
  %v602 = vpop.f32.mrf.mxu0
  %v603 = vadd.f32 %v432, %v602
  %v604 = vpop.f32.mrf.mxu0
  %605 = vmatprep.mubr.f32.mxu0 0.0
  %606 = vmatmul.mubr.f32.gmra.mxu0 %v442
  %v607 = vpop.f32.mrf.mxu0
  %v608 = vadd.f32 %v432, %v607
  %v609 = vpop.f32.mrf.mxu0
  %610 = vmatprep.mubr.f32.mxu0 0.0
  %611 = vmatmul.mubr.f32.gmra.mxu0 %v445
  %v612 = vpop.f32.mrf.mxu0
  %v613 = vadd.f32 %v432, %v612
  %v614 = vpop.f32.mrf.mxu0
  %615 = vmatprep.mubr.f32.mxu0 0.0
  %616 = vmatmul.mubr.f32.gmra.mxu0 %v448
  %v617 = vpop.f32.mrf.mxu0
  %v618 = vadd.f32 %v432, %v617
  %v619 = vpop.f32.mrf.mxu0
  %620 = vmatprep.mubr.f32.mxu0 0.0
  %621 = vmatmul.mubr.f32.gmra.mxu0 %v451
  %v622 = vpop.f32.mrf.mxu0
  %v623 = vadd.f32 %v432, %v622
  %v624 = vpop.f32.mrf.mxu0
  %625 = vmatprep.mubr.f32.mxu0 0.0
  %626 = vmatmul.mubr.f32.gmra.mxu0 %v454
  %v627 = vpop.f32.mrf.mxu0
  %v628 = vadd.f32 %v432, %v627
  %v629 = vpop.f32.mrf.mxu0
  %630 = vmatprep.mubr.f32.mxu0 0.0
  %631 = vmatmul.mubr.f32.gmra.mxu0 %v457
  %v632 = vpop.f32.mrf.mxu0
  %v633 = vadd.f32 %v432, %v632
  %v634 = vpop.f32.mrf.mxu0
  %635 = vmatprep.mubr.f32.mxu0 0.0
  %636 = vmatmul.mubr.f32.gmra.mxu0 %v460
  %v637 = vpop.f32.mrf.mxu0
  %v638 = vadd.f32 %v432, %v637
  %v639 = vpop.f32.mrf.mxu0
  %640 = vmatprep.mubr.f32.mxu0 0.0
  %641 = vmatmul.mubr.f32.gmra.mxu0 %v463
  %v642 = vpop.f32.mrf.mxu0
  %v643 = vadd.f32 %v432, %v642
  %v644 = vpop.f32.mrf.mxu0
  %645 = vmatprep.mubr.f32.mxu0 0.0
  %646 = vmatmul.mubr.f32.gmra.mxu0 %v466
  %v647 = vpop.f32.mrf.mxu0
  %v648 = vadd.f32 %v432, %v647
  %v649 = vpop.f32.mrf.mxu0
  %650 = vmatprep.mubr.f32.mxu0 0.0
  %651 = vmatmul.mubr.f32.gmra.mxu0 %v469
  %v652 = vpop.f32.mrf.mxu0
  %v653 = vadd.f32 %v432, %v652
  %v654 = vpop.f32.mrf.mxu0
  %655 = vmatprep.mubr.f32.mxu0 0.0
  %656 = vmatmul.mubr.f32.gmra.mxu0 %v472
  %v657 = vpop.f32.mrf.mxu0
  %v658 = vadd.f32 %v432, %v657
  %v659 = vpop.f32.mrf.mxu0
  %660 = vmatprep.mubr.f32.mxu0 0.0
  %661 = vmatmul.mubr.f32.gmra.mxu0 %v475
  %v662 = vpop.f32.mrf.mxu0
  %v663 = vadd.f32 %v432, %v662
  %v664 = vpop.f32.mrf.mxu0
  %665 = vmatprep.mubr.f32.mxu0 0.0
  %666 = vmatmul.mubr.f32.gmra.mxu0 %v478
  %v667 = vpop.f32.mrf.mxu0
  %v668 = vadd.f32 %v432, %v667
  %v669 = vpop.f32.mrf.mxu0
  %670 = vmatprep.mubr.f32.mxu0 0.0
  %671 = vmatmul.mubr.f32.gmra.mxu0 %v481
  %v672 = vpop.f32.mrf.mxu0
  %v673 = vadd.f32 %v432, %v672
  %v674 = vpop.f32.mrf.mxu0
  %675 = vmatprep.mubr.f32.mxu0 0.0
  %676 = vmatmul.mubr.f32.gmra.mxu0 %v484
  %v677 = vpop.f32.mrf.mxu0
  %v678 = vadd.f32 %v432, %v677
  %v679 = vpop.f32.mrf.mxu0
  %680 = vmatprep.mubr.f32.mxu0 0.0
  %681 = vmatmul.mubr.f32.gmra.mxu0 %v487
  %v682 = vpop.f32.mrf.mxu0
  %v683 = vadd.f32 %v432, %v682
  %v684 = vpop.f32.mrf.mxu0
  %685 = vmatprep.mubr.f32.mxu0 0.0
  %686 = vmatmul.mubr.f32.gmra.mxu0 %v490
  %v687 = vpop.f32.mrf.mxu0
  %v688 = vadd.f32 %v432, %v687
  %v689 = vpop.f32.mrf.mxu0
  %690 = vmatprep.mubr.f32.mxu0 0.0
  %691 = vmatmul.mubr.f32.gmra.mxu0 %v493
  %v692 = vpop.f32.mrf.mxu0
  %v693 = vadd.f32 %v432, %v692
  %v694 = vpop.f32.mrf.mxu0
  %695 = vmatprep.mubr.f32.mxu0 0.0
  %696 = vmatmul.mubr.f32.gmra.mxu0 %v496
  %v697 = vpop.f32.mrf.mxu0
  %v698 = vadd.f32 %v432, %v697
  %v699 = vpop.f32.mrf.mxu0
  %700 = vmatprep.mubr.f32.mxu0 0.0
  %701 = vmatmul.mubr.f32.gmra.mxu0 %v499
  %v702 = vpop.f32.mrf.mxu0
  %v703 = vadd.f32 %v432, %v702
  %v704 = vpop.f32.mrf.mxu0
  %705 = vmatprep.mubr.f32.mxu0 0.0
  %706 = vmatmul.mubr.f32.gmra.mxu0 %v502
  %v707 = vpop.f32.mrf.mxu0
  %v708 = vadd.f32 %v432, %v707
  %v709 = vpop.f32.mrf.mxu0
  %710 = vmatprep.mubr.f32.mxu0 0.0
  %711 = vmatmul.mubr.f32.gmra.mxu0 %v505
  %v712 = vpop.f32.mrf.mxu0
  %v713 = vadd.f32 %v432, %v712
  %v714 = vpop.f32.mrf.mxu0
  %715 = vmatprep.mubr.f32.mxu0 0.0
  %716 = vmatmul.mubr.f32.gmra.mxu0 %v508
  %v717 = vpop.f32.mrf.mxu0
  %v718 = vadd.f32 %v432, %v717
  %v719 = vpop.f32.mrf.mxu0
  %720 = vmatprep.mubr.f32.mxu0 0.0
  %721 = vmatmul.mubr.f32.gmra.mxu0 %v511
  %v722 = vpop.f32.mrf.mxu0
  %v723 = vadd.f32 %v432, %v722
  %v724 = vpop.f32.mrf.mxu0
  %725 = vmatprep.mubr.f32.mxu0 0.0
  %726 = vmatmul.mubr.f32.gmra.mxu0 %v514
  %v727 = vpop.f32.mrf.mxu0
  %v728 = vadd.f32 %v432, %v727
  %v729 = vpop.f32.mrf.mxu0
  %730 = vmatprep.mubr.f32.mxu0 0.0
  %731 = vmatmul.mubr.f32.gmra.mxu0 %v517
  %v732 = vpop.f32.mrf.mxu0
  %v733 = vadd.f32 %v432, %v732
  %v734 = vpop.f32.mrf.mxu0
  %735 = vmatprep.mubr.f32.mxu0 0.0
  %736 = vmatmul.mubr.f32.gmra.mxu0 %v520
  %v737 = vpop.f32.mrf.mxu0
  %v738 = vadd.f32 %v432, %v737
  %v739 = vpop.f32.mrf.mxu0
  %740 = vmatprep.mubr.f32.mxu0 0.0
  %741 = vmatmul.mubr.f32.gmra.mxu0 %v523
  %v742 = vpop.f32.mrf.mxu0
  %v743 = vadd.f32 %v432, %v742
  %v744 = vpop.f32.mrf.mxu0
  %745 = vmatprep.mubr.f32.mxu0 0.0
  %746 = vmatmul.mubr.f32.gmra.mxu0 %v526
  %v747 = vpop.f32.mrf.mxu0
  %v748 = vadd.f32 %v432, %v747
  %v749 = vpop.f32.mrf.mxu0
  %750 = vmatprep.mubr.f32.mxu0 0.0
  %751 = vmatmul.mubr.f32.gmra.mxu0 %v529
  %v752 = vpop.f32.mrf.mxu0
  %v753 = vadd.f32 %v432, %v752
  %v754 = vpop.f32.mrf.mxu0
  %755 = vdwg.mxu0
  %v756 = vld [vmem:[%s5] sm:$0xff]
  %v757 = vld [vmem:[%s5 + $0x8] sm:$0xff]
  %v758 = vld [vmem:[%s5 + $0x10] sm:$0xff]
  %v759 = vld [vmem:[%s5 + $0x18] sm:$0xff]
  %v760 = vld [vmem:[%s5 + $0x20] sm:$0xff]
  %v761 = vld [vmem:[%s5 + $0x28] sm:$0xff]
  %v762 = vld [vmem:[%s5 + $0x30] sm:$0xff]
  %v763 = vld [vmem:[%s5 + $0x38] sm:$0xff]
  %v764 = vld [vmem:[%s6] sm:$0x1]
  %v766 = vlaneseq
  %v767 = vshrl.u32 %v766, 7
  %v768 = vsub.s32 0, %v767
  %v769 = vrot.slane %v764, %v768
  %vm771 = vcmask 523264
  %v773 = vsel %vm771, %v598, 0
  %v776 = vsel %vm771, %v603, 0
  %v779 = vsel %vm771, %v608, 0
  %v782 = vsel %vm771, %v613, 0
  %v785 = vsel %vm771, %v618, 0
  %v788 = vsel %vm771, %v623, 0
  %v791 = vsel %vm771, %v628, 0
  %v794 = vsel %vm771, %v633, 0
  %v797 = vsel %vm771, %v638, 0
  %v800 = vsel %vm771, %v643, 0
  %v803 = vsel %vm771, %v648, 0
  %v806 = vsel %vm771, %v653, 0
  %v809 = vsel %vm771, %v658, 0
  %v812 = vsel %vm771, %v663, 0
  %v815 = vsel %vm771, %v668, 0
  %v818 = vsel %vm771, %v673, 0
  %v821 = vsel %vm771, %v678, 0
  %v824 = vsel %vm771, %v683, 0
  %v827 = vsel %vm771, %v688, 0
  %v830 = vsel %vm771, %v693, 0
  %v833 = vsel %vm771, %v698, 0
  %v836 = vsel %vm771, %v703, 0
  %v839 = vsel %vm771, %v708, 0
  %v842 = vsel %vm771, %v713, 0
  %v845 = vsel %vm771, %v718, 0
  %v848 = vsel %vm771, %v723, 0
  %v851 = vsel %vm771, %v728, 0
  %v854 = vsel %vm771, %v733, 0
  %v857 = vsel %vm771, %v738, 0
  %v860 = vsel %vm771, %v743, 0
  %v863 = vsel %vm771, %v748, 0
  %v866 = vsel %vm771, %v753, 0
  %868 = vmatprep.subr.mxu0 0.0
  %869 = vmatpush1.msra.mxu0 0.0
  %870 = vmatprep.subr.mxu0 0.0
  %871 = vmatpush1.msra.mxu0 0.0
  %872 = vmatprep.subr.mxu0 0.0
  %873 = vmatpush1.msra.mxu0 0.0
  %874 = vmatprep.subr.mxu0 0.0
  %875 = vmatpush1.msra.mxu0 0.0
  %876 = vmatprep.subr.mxu0 0.0
  %877 = vmatpush1.msra.mxu0 0.0
  %878 = vmatprep.subr.mxu0 0.0
  %879 = vmatpush1.msra.mxu0 0.0
  %880 = vmatprep.subr.mxu0 0.0
  %881 = vmatpush1.msra.mxu0 0.0
  %882 = vmatprep.subr.mxu0 0.0
  %883 = vmatpush1.msra.mxu0 0.0
  %884 = vmatprep.subr.mxu0 0.0
  %885 = vmatpush1.msra.mxu0 %v763
  %886 = vmatprep.subr.mxu0 0.0
  %887 = vmatpush1.msra.mxu0 %v762
  %888 = vmatprep.subr.mxu0 0.0
  %889 = vmatpush1.msra.mxu0 %v761
  %890 = vmatprep.subr.mxu0 0.0
  %891 = vmatpush1.msra.mxu0 %v760
  %892 = vmatprep.subr.mxu0 0.0
  %893 = vmatpush1.msra.mxu0 %v759
  %894 = vmatprep.subr.mxu0 0.0
  %895 = vmatpush1.msra.mxu0 %v758
  %896 = vmatprep.subr.mxu0 0.0
  %897 = vmatpush1.msra.mxu0 %v757
  %898 = vmatprep.subr.mxu0 0.0
  %899 = vmatpush1.msra.mxu0 %v756
  %900 = vmatprep.subr.mxu0 0.0
  %901 = vmatpush2.msra.mxu0 0.0
  %902 = vmatprep.subr.mxu0 0.0
  %903 = vmatpush2.msra.mxu0 0.0
  %904 = vmatprep.subr.mxu0 0.0
  %905 = vmatpush2.msra.mxu0 0.0
  %906 = vmatprep.subr.mxu0 0.0
  %907 = vmatpush2.msra.mxu0 0.0
  %908 = vmatprep.subr.mxu0 0.0
  %909 = vmatpush2.msra.mxu0 0.0
  %910 = vmatprep.subr.mxu0 0.0
  %911 = vmatpush2.msra.mxu0 0.0
  %912 = vmatprep.subr.mxu0 0.0
  %913 = vmatpush2.msra.mxu0 0.0
  %914 = vmatprep.subr.mxu0 0.0
  %915 = vmatpush2.msra.mxu0 0.0
  %916 = vmatprep.subr.mxu0 0.0
  %917 = vmatpush2.msra.mxu0 0.0
  %918 = vmatprep.subr.mxu0 0.0
  %919 = vmatpush2.msra.mxu0 0.0
  %920 = vmatprep.subr.mxu0 0.0
  %921 = vmatpush2.msra.mxu0 0.0
  %922 = vmatprep.subr.mxu0 0.0
  %923 = vmatpush2.msra.mxu0 0.0
  %924 = vmatprep.subr.mxu0 0.0
  %925 = vmatpush2.msra.mxu0 0.0
  %926 = vmatprep.subr.mxu0 0.0
  %927 = vmatpush2.msra.mxu0 0.0
  %928 = vmatprep.subr.mxu0 0.0
  %929 = vmatpush2.msra.mxu0 0.0
  %930 = vmatprep.subr.mxu0 0.0
  %931 = vmatpush2.msra.mxu0 0.0
  %932 = vmatprep.mubr.f32.mxu0 0.0
  %933 = vmatmul.mubr.f32.gmra.mxu0 %v773
  %v934 = vpop.f32.mrf.mxu0
  %v935 = vadd.f32 %v769, %v934
  %v936 = vpop.f32.mrf.mxu0
  %937 = vmatprep.mubr.f32.mxu0 0.0
  %938 = vmatmul.mubr.f32.gmra.mxu0 %v776
  %v939 = vpop.f32.mrf.mxu0
  %v940 = vadd.f32 %v769, %v939
  %v941 = vpop.f32.mrf.mxu0
  %942 = vmatprep.mubr.f32.mxu0 0.0
  %943 = vmatmul.mubr.f32.gmra.mxu0 %v779
  %v944 = vpop.f32.mrf.mxu0
  %v945 = vadd.f32 %v769, %v944
  %v946 = vpop.f32.mrf.mxu0
  %947 = vmatprep.mubr.f32.mxu0 0.0
  %948 = vmatmul.mubr.f32.gmra.mxu0 %v782
  %v949 = vpop.f32.mrf.mxu0
  %v950 = vadd.f32 %v769, %v949
  %v951 = vpop.f32.mrf.mxu0
  %952 = vmatprep.mubr.f32.mxu0 0.0
  %953 = vmatmul.mubr.f32.gmra.mxu0 %v785
  %v954 = vpop.f32.mrf.mxu0
  %v955 = vadd.f32 %v769, %v954
  %v956 = vpop.f32.mrf.mxu0
  %957 = vmatprep.mubr.f32.mxu0 0.0
  %958 = vmatmul.mubr.f32.gmra.mxu0 %v788
  %v959 = vpop.f32.mrf.mxu0
  %v960 = vadd.f32 %v769, %v959
  %v961 = vpop.f32.mrf.mxu0
  %962 = vmatprep.mubr.f32.mxu0 0.0
  %963 = vmatmul.mubr.f32.gmra.mxu0 %v791
  %v964 = vpop.f32.mrf.mxu0
  %v965 = vadd.f32 %v769, %v964
  %v966 = vpop.f32.mrf.mxu0
  %967 = vmatprep.mubr.f32.mxu0 0.0
  %968 = vmatmul.mubr.f32.gmra.mxu0 %v794
  %v969 = vpop.f32.mrf.mxu0
  %v970 = vadd.f32 %v769, %v969
  %v971 = vpop.f32.mrf.mxu0
  %972 = vmatprep.mubr.f32.mxu0 0.0
  %973 = vmatmul.mubr.f32.gmra.mxu0 %v797
  %v974 = vpop.f32.mrf.mxu0
  %v975 = vadd.f32 %v769, %v974
  %v976 = vpop.f32.mrf.mxu0
  %977 = vmatprep.mubr.f32.mxu0 0.0
  %978 = vmatmul.mubr.f32.gmra.mxu0 %v800
  %v979 = vpop.f32.mrf.mxu0
  %v980 = vadd.f32 %v769, %v979
  %v981 = vpop.f32.mrf.mxu0
  %982 = vmatprep.mubr.f32.mxu0 0.0
  %983 = vmatmul.mubr.f32.gmra.mxu0 %v803
  %v984 = vpop.f32.mrf.mxu0
  %v985 = vadd.f32 %v769, %v984
  %v986 = vpop.f32.mrf.mxu0
  %987 = vmatprep.mubr.f32.mxu0 0.0
  %988 = vmatmul.mubr.f32.gmra.mxu0 %v806
  %v989 = vpop.f32.mrf.mxu0
  %v990 = vadd.f32 %v769, %v989
  %v991 = vpop.f32.mrf.mxu0
  %992 = vmatprep.mubr.f32.mxu0 0.0
  %993 = vmatmul.mubr.f32.gmra.mxu0 %v809
  %v994 = vpop.f32.mrf.mxu0
  %v995 = vadd.f32 %v769, %v994
  %v996 = vpop.f32.mrf.mxu0
  %997 = vmatprep.mubr.f32.mxu0 0.0
  %998 = vmatmul.mubr.f32.gmra.mxu0 %v812
  %v999 = vpop.f32.mrf.mxu0
  %v1000 = vadd.f32 %v769, %v999
  %v1001 = vpop.f32.mrf.mxu0
  %1002 = vmatprep.mubr.f32.mxu0 0.0
  %1003 = vmatmul.mubr.f32.gmra.mxu0 %v815
  %v1004 = vpop.f32.mrf.mxu0
  %v1005 = vadd.f32 %v769, %v1004
  %v1006 = vpop.f32.mrf.mxu0
  %1007 = vmatprep.mubr.f32.mxu0 0.0
  %1008 = vmatmul.mubr.f32.gmra.mxu0 %v818
  %v1009 = vpop.f32.mrf.mxu0
  %v1010 = vadd.f32 %v769, %v1009
  %v1011 = vpop.f32.mrf.mxu0
  %1012 = vmatprep.mubr.f32.mxu0 0.0
  %1013 = vmatmul.mubr.f32.gmra.mxu0 %v821
  %v1014 = vpop.f32.mrf.mxu0
  %v1015 = vadd.f32 %v769, %v1014
  %v1016 = vpop.f32.mrf.mxu0
  %1017 = vmatprep.mubr.f32.mxu0 0.0
  %1018 = vmatmul.mubr.f32.gmra.mxu0 %v824
  %v1019 = vpop.f32.mrf.mxu0
  %v1020 = vadd.f32 %v769, %v1019
  %v1021 = vpop.f32.mrf.mxu0
  %1022 = vmatprep.mubr.f32.mxu0 0.0
  %1023 = vmatmul.mubr.f32.gmra.mxu0 %v827
  %v1024 = vpop.f32.mrf.mxu0
  %v1025 = vadd.f32 %v769, %v1024
  %v1026 = vpop.f32.mrf.mxu0
  %1027 = vmatprep.mubr.f32.mxu0 0.0
  %1028 = vmatmul.mubr.f32.gmra.mxu0 %v830
  %v1029 = vpop.f32.mrf.mxu0
  %v1030 = vadd.f32 %v769, %v1029
  %v1031 = vpop.f32.mrf.mxu0
  %1032 = vmatprep.mubr.f32.mxu0 0.0
  %1033 = vmatmul.mubr.f32.gmra.mxu0 %v833
  %v1034 = vpop.f32.mrf.mxu0
  %v1035 = vadd.f32 %v769, %v1034
  %v1036 = vpop.f32.mrf.mxu0
  %1037 = vmatprep.mubr.f32.mxu0 0.0
  %1038 = vmatmul.mubr.f32.gmra.mxu0 %v836
  %v1039 = vpop.f32.mrf.mxu0
  %v1040 = vadd.f32 %v769, %v1039
  %v1041 = vpop.f32.mrf.mxu0
  %1042 = vmatprep.mubr.f32.mxu0 0.0
  %1043 = vmatmul.mubr.f32.gmra.mxu0 %v839
  %v1044 = vpop.f32.mrf.mxu0
  %v1045 = vadd.f32 %v769, %v1044
  %v1046 = vpop.f32.mrf.mxu0
  %1047 = vmatprep.mubr.f32.mxu0 0.0
  %1048 = vmatmul.mubr.f32.gmra.mxu0 %v842
  %v1049 = vpop.f32.mrf.mxu0
  %v1050 = vadd.f32 %v769, %v1049
  %v1051 = vpop.f32.mrf.mxu0
  %1052 = vmatprep.mubr.f32.mxu0 0.0
  %1053 = vmatmul.mubr.f32.gmra.mxu0 %v845
  %v1054 = vpop.f32.mrf.mxu0
  %v1055 = vadd.f32 %v769, %v1054
  %v1056 = vpop.f32.mrf.mxu0
  %1057 = vmatprep.mubr.f32.mxu0 0.0
  %1058 = vmatmul.mubr.f32.gmra.mxu0 %v848
  %v1059 = vpop.f32.mrf.mxu0
  %v1060 = vadd.f32 %v769, %v1059
  %v1061 = vpop.f32.mrf.mxu0
  %1062 = vmatprep.mubr.f32.mxu0 0.0
  %1063 = vmatmul.mubr.f32.gmra.mxu0 %v851
  %v1064 = vpop.f32.mrf.mxu0
  %v1065 = vadd.f32 %v769, %v1064
  %v1066 = vpop.f32.mrf.mxu0
  %1067 = vmatprep.mubr.f32.mxu0 0.0
  %1068 = vmatmul.mubr.f32.gmra.mxu0 %v854
  %v1069 = vpop.f32.mrf.mxu0
  %v1070 = vadd.f32 %v769, %v1069
  %v1071 = vpop.f32.mrf.mxu0
  %1072 = vmatprep.mubr.f32.mxu0 0.0
  %1073 = vmatmul.mubr.f32.gmra.mxu0 %v857
  %v1074 = vpop.f32.mrf.mxu0
  %v1075 = vadd.f32 %v769, %v1074
  %v1076 = vpop.f32.mrf.mxu0
  %1077 = vmatprep.mubr.f32.mxu0 0.0
  %1078 = vmatmul.mubr.f32.gmra.mxu0 %v860
  %v1079 = vpop.f32.mrf.mxu0
  %v1080 = vadd.f32 %v769, %v1079
  %v1081 = vpop.f32.mrf.mxu0
  %1082 = vmatprep.mubr.f32.mxu0 0.0
  %1083 = vmatmul.mubr.f32.gmra.mxu0 %v863
  %v1084 = vpop.f32.mrf.mxu0
  %v1085 = vadd.f32 %v769, %v1084
  %v1086 = vpop.f32.mrf.mxu0
  %1087 = vmatprep.mubr.f32.mxu0 0.0
  %1088 = vmatmul.mubr.f32.gmra.mxu0 %v866
  %v1089 = vpop.f32.mrf.mxu0
  %v1090 = vadd.f32 %v769, %v1089
  %v1091 = vpop.f32.mrf.mxu0
  %1092 = vdwg.mxu0
  %v1093 = vld [vmem:[%s7] sm:$0xff]
  %v1094 = vld [vmem:[%s7 + $0x8] sm:$0xff]
  %v1095 = vld [vmem:[%s7 + $0x10] sm:$0xff]
  %v1096 = vld [vmem:[%s7 + $0x18] sm:$0xff]
  %v1097 = vld [vmem:[%s7 + $0x20] sm:$0xff]
  %v1098 = vld [vmem:[%s7 + $0x28] sm:$0xff]
  %v1099 = vld [vmem:[%s7 + $0x30] sm:$0xff]
  %v1100 = vld [vmem:[%s7 + $0x38] sm:$0xff]
  %v1101 = vld [vmem:[%s7 + $0x40] sm:$0xff]
  %v1102 = vld [vmem:[%s7 + $0x48] sm:$0xff]
  %v1103 = vld [vmem:[%s7 + $0x50] sm:$0xff]
  %v1104 = vld [vmem:[%s7 + $0x58] sm:$0xff]
  %v1105 = vld [vmem:[%s7 + $0x60] sm:$0xff]
  %v1106 = vld [vmem:[%s7 + $0x68] sm:$0xff]
  %v1107 = vld [vmem:[%s7 + $0x70] sm:$0xff]
  %v1108 = vld [vmem:[%s7 + $0x78] sm:$0xff]
  %v1109 = vld [vmem:[%s8] sm:$0x1]
  %v1111 = vlaneseq
  %v1112 = vshrl.u32 %v1111, 7
  %v1113 = vsub.s32 0, %v1112
  %v1114 = vrot.slane %v1109, %v1113
  %1116 = vmatprep.subr.mxu0 0.0
  %1117 = vmatpush1.msra.mxu0 %v1108
  %1118 = vmatprep.subr.mxu0 0.0
  %1119 = vmatpush1.msra.mxu0 %v1107
  %1120 = vmatprep.subr.mxu0 0.0
  %1121 = vmatpush1.msra.mxu0 %v1106
  %1122 = vmatprep.subr.mxu0 0.0
  %1123 = vmatpush1.msra.mxu0 %v1105
  %1124 = vmatprep.subr.mxu0 0.0
  %1125 = vmatpush1.msra.mxu0 %v1104
  %1126 = vmatprep.subr.mxu0 0.0
  %1127 = vmatpush1.msra.mxu0 %v1103
  %1128 = vmatprep.subr.mxu0 0.0
  %1129 = vmatpush1.msra.mxu0 %v1102
  %1130 = vmatprep.subr.mxu0 0.0
  %1131 = vmatpush1.msra.mxu0 %v1101
  %1132 = vmatprep.subr.mxu0 0.0
  %1133 = vmatpush1.msra.mxu0 %v1100
  %1134 = vmatprep.subr.mxu0 0.0
  %1135 = vmatpush1.msra.mxu0 %v1099
  %1136 = vmatprep.subr.mxu0 0.0
  %1137 = vmatpush1.msra.mxu0 %v1098
  %1138 = vmatprep.subr.mxu0 0.0
  %1139 = vmatpush1.msra.mxu0 %v1097
  %1140 = vmatprep.subr.mxu0 0.0
  %1141 = vmatpush1.msra.mxu0 %v1096
  %1142 = vmatprep.subr.mxu0 0.0
  %1143 = vmatpush1.msra.mxu0 %v1095
  %1144 = vmatprep.subr.mxu0 0.0
  %1145 = vmatpush1.msra.mxu0 %v1094
  %1146 = vmatprep.subr.mxu0 0.0
  %1147 = vmatpush1.msra.mxu0 %v1093
  %1148 = vmatprep.subr.mxu0 0.0
  %1149 = vmatpush2.msra.mxu0 0.0
  %1150 = vmatprep.subr.mxu0 0.0
  %1151 = vmatpush2.msra.mxu0 0.0
  %1152 = vmatprep.subr.mxu0 0.0
  %1153 = vmatpush2.msra.mxu0 0.0
  %1154 = vmatprep.subr.mxu0 0.0
  %1155 = vmatpush2.msra.mxu0 0.0
  %1156 = vmatprep.subr.mxu0 0.0
  %1157 = vmatpush2.msra.mxu0 0.0
  %1158 = vmatprep.subr.mxu0 0.0
  %1159 = vmatpush2.msra.mxu0 0.0
  %1160 = vmatprep.subr.mxu0 0.0
  %1161 = vmatpush2.msra.mxu0 0.0
  %1162 = vmatprep.subr.mxu0 0.0
  %1163 = vmatpush2.msra.mxu0 0.0
  %1164 = vmatprep.subr.mxu0 0.0
  %1165 = vmatpush2.msra.mxu0 0.0
  %1166 = vmatprep.subr.mxu0 0.0
  %1167 = vmatpush2.msra.mxu0 0.0
  %1168 = vmatprep.subr.mxu0 0.0
  %1169 = vmatpush2.msra.mxu0 0.0
  %1170 = vmatprep.subr.mxu0 0.0
  %1171 = vmatpush2.msra.mxu0 0.0
  %1172 = vmatprep.subr.mxu0 0.0
  %1173 = vmatpush2.msra.mxu0 0.0
  %1174 = vmatprep.subr.mxu0 0.0
  %1175 = vmatpush2.msra.mxu0 0.0
  %1176 = vmatprep.subr.mxu0 0.0
  %1177 = vmatpush2.msra.mxu0 0.0
  %1178 = vmatprep.subr.mxu0 0.0
  %1179 = vmatpush2.msra.mxu0 0.0
  %1180 = vmatprep.mubr.f32.mxu0 0.0
  %1181 = vmatmul.mubr.f32.gmra.mxu0 %v935
  %v1182 = vpop.f32.mrf.mxu0
  %v1183 = vadd.f32 %v1114, %v1182
  %v1184 = vpop.f32.mrf.mxu0
  %1185 = vmatprep.mubr.f32.mxu0 0.0
  %1186 = vmatmul.mubr.f32.gmra.mxu0 %v940
  %v1187 = vpop.f32.mrf.mxu0
  %v1188 = vadd.f32 %v1114, %v1187
  %v1189 = vpop.f32.mrf.mxu0
  %1190 = vmatprep.mubr.f32.mxu0 0.0
  %1191 = vmatmul.mubr.f32.gmra.mxu0 %v945
  %v1192 = vpop.f32.mrf.mxu0
  %v1193 = vadd.f32 %v1114, %v1192
  %v1194 = vpop.f32.mrf.mxu0
  %1195 = vmatprep.mubr.f32.mxu0 0.0
  %1196 = vmatmul.mubr.f32.gmra.mxu0 %v950
  %v1197 = vpop.f32.mrf.mxu0
  %v1198 = vadd.f32 %v1114, %v1197
  %v1199 = vpop.f32.mrf.mxu0
  %1200 = vmatprep.mubr.f32.mxu0 0.0
  %1201 = vmatmul.mubr.f32.gmra.mxu0 %v955
  %v1202 = vpop.f32.mrf.mxu0
  %v1203 = vadd.f32 %v1114, %v1202
  %v1204 = vpop.f32.mrf.mxu0
  %1205 = vmatprep.mubr.f32.mxu0 0.0
  %1206 = vmatmul.mubr.f32.gmra.mxu0 %v960
  %v1207 = vpop.f32.mrf.mxu0
  %v1208 = vadd.f32 %v1114, %v1207
  %v1209 = vpop.f32.mrf.mxu0
  %1210 = vmatprep.mubr.f32.mxu0 0.0
  %1211 = vmatmul.mubr.f32.gmra.mxu0 %v965
  %v1212 = vpop.f32.mrf.mxu0
  %v1213 = vadd.f32 %v1114, %v1212
  %v1214 = vpop.f32.mrf.mxu0
  %1215 = vmatprep.mubr.f32.mxu0 0.0
  %1216 = vmatmul.mubr.f32.gmra.mxu0 %v970
  %v1217 = vpop.f32.mrf.mxu0
  %v1218 = vadd.f32 %v1114, %v1217
  %v1219 = vpop.f32.mrf.mxu0
  %1220 = vmatprep.mubr.f32.mxu0 0.0
  %1221 = vmatmul.mubr.f32.gmra.mxu0 %v975
  %v1222 = vpop.f32.mrf.mxu0
  %v1223 = vadd.f32 %v1114, %v1222
  %v1224 = vpop.f32.mrf.mxu0
  %1225 = vmatprep.mubr.f32.mxu0 0.0
  %1226 = vmatmul.mubr.f32.gmra.mxu0 %v980
  %v1227 = vpop.f32.mrf.mxu0
  %v1228 = vadd.f32 %v1114, %v1227
  %v1229 = vpop.f32.mrf.mxu0
  %1230 = vmatprep.mubr.f32.mxu0 0.0
  %1231 = vmatmul.mubr.f32.gmra.mxu0 %v985
  %v1232 = vpop.f32.mrf.mxu0
  %v1233 = vadd.f32 %v1114, %v1232
  %v1234 = vpop.f32.mrf.mxu0
  %1235 = vmatprep.mubr.f32.mxu0 0.0
  %1236 = vmatmul.mubr.f32.gmra.mxu0 %v990
  %v1237 = vpop.f32.mrf.mxu0
  %v1238 = vadd.f32 %v1114, %v1237
  %v1239 = vpop.f32.mrf.mxu0
  %1240 = vmatprep.mubr.f32.mxu0 0.0
  %1241 = vmatmul.mubr.f32.gmra.mxu0 %v995
  %v1242 = vpop.f32.mrf.mxu0
  %v1243 = vadd.f32 %v1114, %v1242
  %v1244 = vpop.f32.mrf.mxu0
  %1245 = vmatprep.mubr.f32.mxu0 0.0
  %1246 = vmatmul.mubr.f32.gmra.mxu0 %v1000
  %v1247 = vpop.f32.mrf.mxu0
  %v1248 = vadd.f32 %v1114, %v1247
  %v1249 = vpop.f32.mrf.mxu0
  %1250 = vmatprep.mubr.f32.mxu0 0.0
  %1251 = vmatmul.mubr.f32.gmra.mxu0 %v1005
  %v1252 = vpop.f32.mrf.mxu0
  %v1253 = vadd.f32 %v1114, %v1252
  %v1254 = vpop.f32.mrf.mxu0
  %1255 = vmatprep.mubr.f32.mxu0 0.0
  %1256 = vmatmul.mubr.f32.gmra.mxu0 %v1010
  %v1257 = vpop.f32.mrf.mxu0
  %v1258 = vadd.f32 %v1114, %v1257
  %v1259 = vpop.f32.mrf.mxu0
  %1260 = vmatprep.mubr.f32.mxu0 0.0
  %1261 = vmatmul.mubr.f32.gmra.mxu0 %v1015
  %v1262 = vpop.f32.mrf.mxu0
  %v1263 = vadd.f32 %v1114, %v1262
  %v1264 = vpop.f32.mrf.mxu0
  %1265 = vmatprep.mubr.f32.mxu0 0.0
  %1266 = vmatmul.mubr.f32.gmra.mxu0 %v1020
  %v1267 = vpop.f32.mrf.mxu0
  %v1268 = vadd.f32 %v1114, %v1267
  %v1269 = vpop.f32.mrf.mxu0
  %1270 = vmatprep.mubr.f32.mxu0 0.0
  %1271 = vmatmul.mubr.f32.gmra.mxu0 %v1025
  %v1272 = vpop.f32.mrf.mxu0
  %v1273 = vadd.f32 %v1114, %v1272
  %v1274 = vpop.f32.mrf.mxu0
  %1275 = vmatprep.mubr.f32.mxu0 0.0
  %1276 = vmatmul.mubr.f32.gmra.mxu0 %v1030
  %v1277 = vpop.f32.mrf.mxu0
  %v1278 = vadd.f32 %v1114, %v1277
  %v1279 = vpop.f32.mrf.mxu0
  %1280 = vmatprep.mubr.f32.mxu0 0.0
  %1281 = vmatmul.mubr.f32.gmra.mxu0 %v1035
  %v1282 = vpop.f32.mrf.mxu0
  %v1283 = vadd.f32 %v1114, %v1282
  %v1284 = vpop.f32.mrf.mxu0
  %1285 = vmatprep.mubr.f32.mxu0 0.0
  %1286 = vmatmul.mubr.f32.gmra.mxu0 %v1040
  %v1287 = vpop.f32.mrf.mxu0
  %v1288 = vadd.f32 %v1114, %v1287
  %v1289 = vpop.f32.mrf.mxu0
  %1290 = vmatprep.mubr.f32.mxu0 0.0
  %1291 = vmatmul.mubr.f32.gmra.mxu0 %v1045
  %v1292 = vpop.f32.mrf.mxu0
  %v1293 = vadd.f32 %v1114, %v1292
  %v1294 = vpop.f32.mrf.mxu0
  %1295 = vmatprep.mubr.f32.mxu0 0.0
  %1296 = vmatmul.mubr.f32.gmra.mxu0 %v1050
  %v1297 = vpop.f32.mrf.mxu0
  %v1298 = vadd.f32 %v1114, %v1297
  %v1299 = vpop.f32.mrf.mxu0
  %1300 = vmatprep.mubr.f32.mxu0 0.0
  %1301 = vmatmul.mubr.f32.gmra.mxu0 %v1055
  %v1302 = vpop.f32.mrf.mxu0
  %v1303 = vadd.f32 %v1114, %v1302
  %v1304 = vpop.f32.mrf.mxu0
  %1305 = vmatprep.mubr.f32.mxu0 0.0
  %1306 = vmatmul.mubr.f32.gmra.mxu0 %v1060
  %v1307 = vpop.f32.mrf.mxu0
  %v1308 = vadd.f32 %v1114, %v1307
  %v1309 = vpop.f32.mrf.mxu0
  %1310 = vmatprep.mubr.f32.mxu0 0.0
  %1311 = vmatmul.mubr.f32.gmra.mxu0 %v1065
  %v1312 = vpop.f32.mrf.mxu0
  %v1313 = vadd.f32 %v1114, %v1312
  %v1314 = vpop.f32.mrf.mxu0
  %1315 = vmatprep.mubr.f32.mxu0 0.0
  %1316 = vmatmul.mubr.f32.gmra.mxu0 %v1070
  %v1317 = vpop.f32.mrf.mxu0
  %v1318 = vadd.f32 %v1114, %v1317
  %v1319 = vpop.f32.mrf.mxu0
  %1320 = vmatprep.mubr.f32.mxu0 0.0
  %1321 = vmatmul.mubr.f32.gmra.mxu0 %v1075
  %v1322 = vpop.f32.mrf.mxu0
  %v1323 = vadd.f32 %v1114, %v1322
  %v1324 = vpop.f32.mrf.mxu0
  %1325 = vmatprep.mubr.f32.mxu0 0.0
  %1326 = vmatmul.mubr.f32.gmra.mxu0 %v1080
  %v1327 = vpop.f32.mrf.mxu0
  %v1328 = vadd.f32 %v1114, %v1327
  %v1329 = vpop.f32.mrf.mxu0
  %1330 = vmatprep.mubr.f32.mxu0 0.0
  %1331 = vmatmul.mubr.f32.gmra.mxu0 %v1085
  %v1332 = vpop.f32.mrf.mxu0
  %v1333 = vadd.f32 %v1114, %v1332
  %v1334 = vpop.f32.mrf.mxu0
  %1335 = vmatprep.mubr.f32.mxu0 0.0
  %1336 = vmatmul.mubr.f32.gmra.mxu0 %v1090
  %v1337 = vpop.f32.mrf.mxu0
  %v1338 = vadd.f32 %v1114, %v1337
  %v1339 = vpop.f32.mrf.mxu0
  %1340 = vdwg.mxu0
  %v1341 = vld [vmem:[%s9] sm:$0xff]
  %v1342 = vld [vmem:[%s9 + $0x8] sm:$0xff]
  %v1343 = vld [vmem:[%s9 + $0x10] sm:$0xff]
  %v1344 = vld [vmem:[%s9 + $0x18] sm:$0xff]
  %v1345 = vld [vmem:[%s9 + $0x20] sm:$0xff]
  %v1346 = vld [vmem:[%s9 + $0x28] sm:$0xff]
  %v1347 = vld [vmem:[%s9 + $0x30] sm:$0xff]
  %v1348 = vld [vmem:[%s9 + $0x38] sm:$0xff]
  %v1349 = vld [vmem:[%s9 + $0x40] sm:$0xff]
  %v1350 = vld [vmem:[%s9 + $0x48] sm:$0xff]
  %v1351 = vld [vmem:[%s9 + $0x50] sm:$0xff]
  %v1352 = vld [vmem:[%s9 + $0x58] sm:$0xff]
  %v1353 = vld [vmem:[%s9 + $0x60] sm:$0xff]
  %v1354 = vld [vmem:[%s9 + $0x68] sm:$0xff]
  %v1355 = vld [vmem:[%s9 + $0x70] sm:$0xff]
  %v1356 = vld [vmem:[%s9 + $0x78] sm:$0xff]
  %v1357 = vld [vmem:[%s10] sm:$0x1]
  %v1359 = vlaneseq
  %v1360 = vshrl.u32 %v1359, 7
  %v1361 = vsub.s32 0, %v1360
  %v1362 = vrot.slane %v1357, %v1361
  %1364 = vmatprep.subr.mxu0 0.0
  %1365 = vmatpush1.msra.mxu0 %v1356
  %1366 = vmatprep.subr.mxu0 0.0
  %1367 = vmatpush1.msra.mxu0 %v1355
  %1368 = vmatprep.subr.mxu0 0.0
  %1369 = vmatpush1.msra.mxu0 %v1354
  %1370 = vmatprep.subr.mxu0 0.0
  %1371 = vmatpush1.msra.mxu0 %v1353
  %1372 = vmatprep.subr.mxu0 0.0
  %1373 = vmatpush1.msra.mxu0 %v1352
  %1374 = vmatprep.subr.mxu0 0.0
  %1375 = vmatpush1.msra.mxu0 %v1351
  %1376 = vmatprep.subr.mxu0 0.0
  %1377 = vmatpush1.msra.mxu0 %v1350
  %1378 = vmatprep.subr.mxu0 0.0
  %1379 = vmatpush1.msra.mxu0 %v1349
  %1380 = vmatprep.subr.mxu0 0.0
  %1381 = vmatpush1.msra.mxu0 %v1348
  %1382 = vmatprep.subr.mxu0 0.0
  %1383 = vmatpush1.msra.mxu0 %v1347
  %1384 = vmatprep.subr.mxu0 0.0
  %1385 = vmatpush1.msra.mxu0 %v1346
  %1386 = vmatprep.subr.mxu0 0.0
  %1387 = vmatpush1.msra.mxu0 %v1345
  %1388 = vmatprep.subr.mxu0 0.0
  %1389 = vmatpush1.msra.mxu0 %v1344
  %1390 = vmatprep.subr.mxu0 0.0
  %1391 = vmatpush1.msra.mxu0 %v1343
  %1392 = vmatprep.subr.mxu0 0.0
  %1393 = vmatpush1.msra.mxu0 %v1342
  %1394 = vmatprep.subr.mxu0 0.0
  %1395 = vmatpush1.msra.mxu0 %v1341
  %1396 = vmatprep.subr.mxu0 0.0
  %1397 = vmatpush2.msra.mxu0 0.0
  %1398 = vmatprep.subr.mxu0 0.0
  %1399 = vmatpush2.msra.mxu0 0.0
  %1400 = vmatprep.subr.mxu0 0.0
  %1401 = vmatpush2.msra.mxu0 0.0
  %1402 = vmatprep.subr.mxu0 0.0
  %1403 = vmatpush2.msra.mxu0 0.0
  %1404 = vmatprep.subr.mxu0 0.0
  %1405 = vmatpush2.msra.mxu0 0.0
  %1406 = vmatprep.subr.mxu0 0.0
  %1407 = vmatpush2.msra.mxu0 0.0
  %1408 = vmatprep.subr.mxu0 0.0
  %1409 = vmatpush2.msra.mxu0 0.0
  %1410 = vmatprep.subr.mxu0 0.0
  %1411 = vmatpush2.msra.mxu0 0.0
  %1412 = vmatprep.subr.mxu0 0.0
  %1413 = vmatpush2.msra.mxu0 0.0
  %1414 = vmatprep.subr.mxu0 0.0
  %1415 = vmatpush2.msra.mxu0 0.0
  %1416 = vmatprep.subr.mxu0 0.0
  %1417 = vmatpush2.msra.mxu0 0.0
  %1418 = vmatprep.subr.mxu0 0.0
  %1419 = vmatpush2.msra.mxu0 0.0
  %1420 = vmatprep.subr.mxu0 0.0
  %1421 = vmatpush2.msra.mxu0 0.0
  %1422 = vmatprep.subr.mxu0 0.0
  %1423 = vmatpush2.msra.mxu0 0.0
  %1424 = vmatprep.subr.mxu0 0.0
  %1425 = vmatpush2.msra.mxu0 0.0
  %1426 = vmatprep.subr.mxu0 0.0
  %1427 = vmatpush2.msra.mxu0 0.0
  %1428 = vmatprep.mubr.f32.mxu0 0.0
  %1429 = vmatmul.mubr.f32.gmra.mxu0 %v1183
  %v1430 = vpop.f32.mrf.mxu0
  %v1431 = vadd.f32 %v1362, %v1430
  %v1432 = vpop.f32.mrf.mxu0
  %1433 = vmatprep.mubr.f32.mxu0 0.0
  %1434 = vmatmul.mubr.f32.gmra.mxu0 %v1188
  %v1435 = vpop.f32.mrf.mxu0
  %v1436 = vadd.f32 %v1362, %v1435
  %v1437 = vpop.f32.mrf.mxu0
  %1438 = vmatprep.mubr.f32.mxu0 0.0
  %1439 = vmatmul.mubr.f32.gmra.mxu0 %v1193
  %v1440 = vpop.f32.mrf.mxu0
  %v1441 = vadd.f32 %v1362, %v1440
  %v1442 = vpop.f32.mrf.mxu0
  %1443 = vmatprep.mubr.f32.mxu0 0.0
  %1444 = vmatmul.mubr.f32.gmra.mxu0 %v1198
  %v1445 = vpop.f32.mrf.mxu0
  %v1446 = vadd.f32 %v1362, %v1445
  %v1447 = vpop.f32.mrf.mxu0
  %1448 = vmatprep.mubr.f32.mxu0 0.0
  %1449 = vmatmul.mubr.f32.gmra.mxu0 %v1203
  %v1450 = vpop.f32.mrf.mxu0
  %v1451 = vadd.f32 %v1362, %v1450
  %v1452 = vpop.f32.mrf.mxu0
  %1453 = vmatprep.mubr.f32.mxu0 0.0
  %1454 = vmatmul.mubr.f32.gmra.mxu0 %v1208
  %v1455 = vpop.f32.mrf.mxu0
  %v1456 = vadd.f32 %v1362, %v1455
  %v1457 = vpop.f32.mrf.mxu0
  %1458 = vmatprep.mubr.f32.mxu0 0.0
  %1459 = vmatmul.mubr.f32.gmra.mxu0 %v1213
  %v1460 = vpop.f32.mrf.mxu0
  %v1461 = vadd.f32 %v1362, %v1460
  %v1462 = vpop.f32.mrf.mxu0
  %1463 = vmatprep.mubr.f32.mxu0 0.0
  %1464 = vmatmul.mubr.f32.gmra.mxu0 %v1218
  %v1465 = vpop.f32.mrf.mxu0
  %v1466 = vadd.f32 %v1362, %v1465
  %v1467 = vpop.f32.mrf.mxu0
  %1468 = vmatprep.mubr.f32.mxu0 0.0
  %1469 = vmatmul.mubr.f32.gmra.mxu0 %v1223
  %v1470 = vpop.f32.mrf.mxu0
  %v1471 = vadd.f32 %v1362, %v1470
  %v1472 = vpop.f32.mrf.mxu0
  %1473 = vmatprep.mubr.f32.mxu0 0.0
  %1474 = vmatmul.mubr.f32.gmra.mxu0 %v1228
  %v1475 = vpop.f32.mrf.mxu0
  %v1476 = vadd.f32 %v1362, %v1475
  %v1477 = vpop.f32.mrf.mxu0
  %1478 = vmatprep.mubr.f32.mxu0 0.0
  %1479 = vmatmul.mubr.f32.gmra.mxu0 %v1233
  %v1480 = vpop.f32.mrf.mxu0
  %v1481 = vadd.f32 %v1362, %v1480
  %v1482 = vpop.f32.mrf.mxu0
  %1483 = vmatprep.mubr.f32.mxu0 0.0
  %1484 = vmatmul.mubr.f32.gmra.mxu0 %v1238
  %v1485 = vpop.f32.mrf.mxu0
  %v1486 = vadd.f32 %v1362, %v1485
  %v1487 = vpop.f32.mrf.mxu0
  %1488 = vmatprep.mubr.f32.mxu0 0.0
  %1489 = vmatmul.mubr.f32.gmra.mxu0 %v1243
  %v1490 = vpop.f32.mrf.mxu0
  %v1491 = vadd.f32 %v1362, %v1490
  %v1492 = vpop.f32.mrf.mxu0
  %1493 = vmatprep.mubr.f32.mxu0 0.0
  %1494 = vmatmul.mubr.f32.gmra.mxu0 %v1248
  %v1495 = vpop.f32.mrf.mxu0
  %v1496 = vadd.f32 %v1362, %v1495
  %v1497 = vpop.f32.mrf.mxu0
  %1498 = vmatprep.mubr.f32.mxu0 0.0
  %1499 = vmatmul.mubr.f32.gmra.mxu0 %v1253
  %v1500 = vpop.f32.mrf.mxu0
  %v1501 = vadd.f32 %v1362, %v1500
  %v1502 = vpop.f32.mrf.mxu0
  %1503 = vmatprep.mubr.f32.mxu0 0.0
  %1504 = vmatmul.mubr.f32.gmra.mxu0 %v1258
  %v1505 = vpop.f32.mrf.mxu0
  %v1506 = vadd.f32 %v1362, %v1505
  %v1507 = vpop.f32.mrf.mxu0
  %1508 = vmatprep.mubr.f32.mxu0 0.0
  %1509 = vmatmul.mubr.f32.gmra.mxu0 %v1263
  %v1510 = vpop.f32.mrf.mxu0
  %v1511 = vadd.f32 %v1362, %v1510
  %v1512 = vpop.f32.mrf.mxu0
  %1513 = vmatprep.mubr.f32.mxu0 0.0
  %1514 = vmatmul.mubr.f32.gmra.mxu0 %v1268
  %v1515 = vpop.f32.mrf.mxu0
  %v1516 = vadd.f32 %v1362, %v1515
  %v1517 = vpop.f32.mrf.mxu0
  %1518 = vmatprep.mubr.f32.mxu0 0.0
  %1519 = vmatmul.mubr.f32.gmra.mxu0 %v1273
  %v1520 = vpop.f32.mrf.mxu0
  %v1521 = vadd.f32 %v1362, %v1520
  %v1522 = vpop.f32.mrf.mxu0
  %1523 = vmatprep.mubr.f32.mxu0 0.0
  %1524 = vmatmul.mubr.f32.gmra.mxu0 %v1278
  %v1525 = vpop.f32.mrf.mxu0
  %v1526 = vadd.f32 %v1362, %v1525
  %v1527 = vpop.f32.mrf.mxu0
  %1528 = vmatprep.mubr.f32.mxu0 0.0
  %1529 = vmatmul.mubr.f32.gmra.mxu0 %v1283
  %v1530 = vpop.f32.mrf.mxu0
  %v1531 = vadd.f32 %v1362, %v1530
  %v1532 = vpop.f32.mrf.mxu0
  %1533 = vmatprep.mubr.f32.mxu0 0.0
  %1534 = vmatmul.mubr.f32.gmra.mxu0 %v1288
  %v1535 = vpop.f32.mrf.mxu0
  %v1536 = vadd.f32 %v1362, %v1535
  %v1537 = vpop.f32.mrf.mxu0
  %1538 = vmatprep.mubr.f32.mxu0 0.0
  %1539 = vmatmul.mubr.f32.gmra.mxu0 %v1293
  %v1540 = vpop.f32.mrf.mxu0
  %v1541 = vadd.f32 %v1362, %v1540
  %v1542 = vpop.f32.mrf.mxu0
  %1543 = vmatprep.mubr.f32.mxu0 0.0
  %1544 = vmatmul.mubr.f32.gmra.mxu0 %v1298
  %v1545 = vpop.f32.mrf.mxu0
  %v1546 = vadd.f32 %v1362, %v1545
  %v1547 = vpop.f32.mrf.mxu0
  %1548 = vmatprep.mubr.f32.mxu0 0.0
  %1549 = vmatmul.mubr.f32.gmra.mxu0 %v1303
  %v1550 = vpop.f32.mrf.mxu0
  %v1551 = vadd.f32 %v1362, %v1550
  %v1552 = vpop.f32.mrf.mxu0
  %1553 = vmatprep.mubr.f32.mxu0 0.0
  %1554 = vmatmul.mubr.f32.gmra.mxu0 %v1308
  %v1555 = vpop.f32.mrf.mxu0
  %v1556 = vadd.f32 %v1362, %v1555
  %v1557 = vpop.f32.mrf.mxu0
  %1558 = vmatprep.mubr.f32.mxu0 0.0
  %1559 = vmatmul.mubr.f32.gmra.mxu0 %v1313
  %v1560 = vpop.f32.mrf.mxu0
  %v1561 = vadd.f32 %v1362, %v1560
  %v1562 = vpop.f32.mrf.mxu0
  %1563 = vmatprep.mubr.f32.mxu0 0.0
  %1564 = vmatmul.mubr.f32.gmra.mxu0 %v1318
  %v1565 = vpop.f32.mrf.mxu0
  %v1566 = vadd.f32 %v1362, %v1565
  %v1567 = vpop.f32.mrf.mxu0
  %1568 = vmatprep.mubr.f32.mxu0 0.0
  %1569 = vmatmul.mubr.f32.gmra.mxu0 %v1323
  %v1570 = vpop.f32.mrf.mxu0
  %v1571 = vadd.f32 %v1362, %v1570
  %v1572 = vpop.f32.mrf.mxu0
  %1573 = vmatprep.mubr.f32.mxu0 0.0
  %1574 = vmatmul.mubr.f32.gmra.mxu0 %v1328
  %v1575 = vpop.f32.mrf.mxu0
  %v1576 = vadd.f32 %v1362, %v1575
  %v1577 = vpop.f32.mrf.mxu0
  %1578 = vmatprep.mubr.f32.mxu0 0.0
  %1579 = vmatmul.mubr.f32.gmra.mxu0 %v1333
  %v1580 = vpop.f32.mrf.mxu0
  %v1581 = vadd.f32 %v1362, %v1580
  %v1582 = vpop.f32.mrf.mxu0
  %1583 = vmatprep.mubr.f32.mxu0 0.0
  %1584 = vmatmul.mubr.f32.gmra.mxu0 %v1338
  %v1585 = vpop.f32.mrf.mxu0
  %v1586 = vadd.f32 %v1362, %v1585
  %v1587 = vpop.f32.mrf.mxu0
  %1588 = vdwg.mxu0
  %v1589 = vld [vmem:[%s11] sm:$0xff]
  %v1590 = vld [vmem:[%s11 + $0x8] sm:$0xff]
  %v1591 = vld [vmem:[%s11 + $0x10] sm:$0xff]
  %v1592 = vld [vmem:[%s11 + $0x18] sm:$0xff]
  %v1593 = vld [vmem:[%s11 + $0x20] sm:$0xff]
  %v1594 = vld [vmem:[%s11 + $0x28] sm:$0xff]
  %v1595 = vld [vmem:[%s11 + $0x30] sm:$0xff]
  %v1596 = vld [vmem:[%s11 + $0x38] sm:$0xff]
  %v1597 = vld [vmem:[%s12] sm:$0x1]
  %v1599 = vlaneseq
  %v1600 = vshrl.u32 %v1599, 7
  %v1601 = vsub.s32 0, %v1600
  %v1602 = vrot.slane %v1597, %v1601
  %v1605 = vsel %vm771, %v1431, 0
  %v1608 = vsel %vm771, %v1436, 0
  %v1611 = vsel %vm771, %v1441, 0
  %v1614 = vsel %vm771, %v1446, 0
  %v1617 = vsel %vm771, %v1451, 0
  %v1620 = vsel %vm771, %v1456, 0
  %v1623 = vsel %vm771, %v1461, 0
  %v1626 = vsel %vm771, %v1466, 0
  %v1629 = vsel %vm771, %v1471, 0
  %v1632 = vsel %vm771, %v1476, 0
  %v1635 = vsel %vm771, %v1481, 0
  %v1638 = vsel %vm771, %v1486, 0
  %v1641 = vsel %vm771, %v1491, 0
  %v1644 = vsel %vm771, %v1496, 0
  %v1647 = vsel %vm771, %v1501, 0
  %v1650 = vsel %vm771, %v1506, 0
  %v1653 = vsel %vm771, %v1511, 0
  %v1656 = vsel %vm771, %v1516, 0
  %v1659 = vsel %vm771, %v1521, 0
  %v1662 = vsel %vm771, %v1526, 0
  %v1665 = vsel %vm771, %v1531, 0
  %v1668 = vsel %vm771, %v1536, 0
  %v1671 = vsel %vm771, %v1541, 0
  %v1674 = vsel %vm771, %v1546, 0
  %v1677 = vsel %vm771, %v1551, 0
  %v1680 = vsel %vm771, %v1556, 0
  %v1683 = vsel %vm771, %v1561, 0
  %v1686 = vsel %vm771, %v1566, 0
  %v1689 = vsel %vm771, %v1571, 0
  %v1692 = vsel %vm771, %v1576, 0
  %v1695 = vsel %vm771, %v1581, 0
  %v1698 = vsel %vm771, %v1586, 0
  %1700 = vmatprep.subr.mxu0 0.0
  %1701 = vmatpush1.msra.mxu0 0.0
  %1702 = vmatprep.subr.mxu0 0.0
  %1703 = vmatpush1.msra.mxu0 0.0
  %1704 = vmatprep.subr.mxu0 0.0
  %1705 = vmatpush1.msra.mxu0 0.0
  %1706 = vmatprep.subr.mxu0 0.0
  %1707 = vmatpush1.msra.mxu0 0.0
  %1708 = vmatprep.subr.mxu0 0.0
  %1709 = vmatpush1.msra.mxu0 0.0
  %1710 = vmatprep.subr.mxu0 0.0
  %1711 = vmatpush1.msra.mxu0 0.0
  %1712 = vmatprep.subr.mxu0 0.0
  %1713 = vmatpush1.msra.mxu0 0.0
  %1714 = vmatprep.subr.mxu0 0.0
  %1715 = vmatpush1.msra.mxu0 0.0
  %1716 = vmatprep.subr.mxu0 0.0
  %1717 = vmatpush1.msra.mxu0 %v1596
  %1718 = vmatprep.subr.mxu0 0.0
  %1719 = vmatpush1.msra.mxu0 %v1595
  %1720 = vmatprep.subr.mxu0 0.0
  %1721 = vmatpush1.msra.mxu0 %v1594
  %1722 = vmatprep.subr.mxu0 0.0
  %1723 = vmatpush1.msra.mxu0 %v1593
  %1724 = vmatprep.subr.mxu0 0.0
  %1725 = vmatpush1.msra.mxu0 %v1592
  %1726 = vmatprep.subr.mxu0 0.0
  %1727 = vmatpush1.msra.mxu0 %v1591
  %1728 = vmatprep.subr.mxu0 0.0
  %1729 = vmatpush1.msra.mxu0 %v1590
  %1730 = vmatprep.subr.mxu0 0.0
  %1731 = vmatpush1.msra.mxu0 %v1589
  %1732 = vmatprep.subr.mxu0 0.0
  %1733 = vmatpush2.msra.mxu0 0.0
  %1734 = vmatprep.subr.mxu0 0.0
  %1735 = vmatpush2.msra.mxu0 0.0
  %1736 = vmatprep.subr.mxu0 0.0
  %1737 = vmatpush2.msra.mxu0 0.0
  %1738 = vmatprep.subr.mxu0 0.0
  %1739 = vmatpush2.msra.mxu0 0.0
  %1740 = vmatprep.subr.mxu0 0.0
  %1741 = vmatpush2.msra.mxu0 0.0
  %1742 = vmatprep.subr.mxu0 0.0
  %1743 = vmatpush2.msra.mxu0 0.0
  %1744 = vmatprep.subr.mxu0 0.0
  %1745 = vmatpush2.msra.mxu0 0.0
  %1746 = vmatprep.subr.mxu0 0.0
  %1747 = vmatpush2.msra.mxu0 0.0
  %1748 = vmatprep.subr.mxu0 0.0
  %1749 = vmatpush2.msra.mxu0 0.0
  %1750 = vmatprep.subr.mxu0 0.0
  %1751 = vmatpush2.msra.mxu0 0.0
  %1752 = vmatprep.subr.mxu0 0.0
  %1753 = vmatpush2.msra.mxu0 0.0
  %1754 = vmatprep.subr.mxu0 0.0
  %1755 = vmatpush2.msra.mxu0 0.0
  %1756 = vmatprep.subr.mxu0 0.0
  %1757 = vmatpush2.msra.mxu0 0.0
  %1758 = vmatprep.subr.mxu0 0.0
  %1759 = vmatpush2.msra.mxu0 0.0
  %1760 = vmatprep.subr.mxu0 0.0
  %1761 = vmatpush2.msra.mxu0 0.0
  %1762 = vmatprep.subr.mxu0 0.0
  %1763 = vmatpush2.msra.mxu0 0.0
  %1764 = vmatprep.mubr.f32.mxu0 0.0
  %1765 = vmatmul.mubr.f32.gmra.mxu0 %v1605
  %v1766 = vpop.f32.mrf.mxu0
  %v1767 = vadd.f32 %v1602, %v1766
  %v1768 = vpop.f32.mrf.mxu0
  %1769 = vmatprep.mubr.f32.mxu0 0.0
  %1770 = vmatmul.mubr.f32.gmra.mxu0 %v1608
  %v1771 = vpop.f32.mrf.mxu0
  %v1772 = vadd.f32 %v1602, %v1771
  %v1773 = vpop.f32.mrf.mxu0
  %1774 = vmatprep.mubr.f32.mxu0 0.0
  %1775 = vmatmul.mubr.f32.gmra.mxu0 %v1611
  %v1776 = vpop.f32.mrf.mxu0
  %v1777 = vadd.f32 %v1602, %v1776
  %v1778 = vpop.f32.mrf.mxu0
  %1779 = vmatprep.mubr.f32.mxu0 0.0
  %1780 = vmatmul.mubr.f32.gmra.mxu0 %v1614
  %v1781 = vpop.f32.mrf.mxu0
  %v1782 = vadd.f32 %v1602, %v1781
  %v1783 = vpop.f32.mrf.mxu0
  %1784 = vmatprep.mubr.f32.mxu0 0.0
  %1785 = vmatmul.mubr.f32.gmra.mxu0 %v1617
  %v1786 = vpop.f32.mrf.mxu0
  %v1787 = vadd.f32 %v1602, %v1786
  %v1788 = vpop.f32.mrf.mxu0
  %1789 = vmatprep.mubr.f32.mxu0 0.0
  %1790 = vmatmul.mubr.f32.gmra.mxu0 %v1620
  %v1791 = vpop.f32.mrf.mxu0
  %v1792 = vadd.f32 %v1602, %v1791
  %v1793 = vpop.f32.mrf.mxu0
  %1794 = vmatprep.mubr.f32.mxu0 0.0
  %1795 = vmatmul.mubr.f32.gmra.mxu0 %v1623
  %v1796 = vpop.f32.mrf.mxu0
  %v1797 = vadd.f32 %v1602, %v1796
  %v1798 = vpop.f32.mrf.mxu0
  %1799 = vmatprep.mubr.f32.mxu0 0.0
  %1800 = vmatmul.mubr.f32.gmra.mxu0 %v1626
  %v1801 = vpop.f32.mrf.mxu0
  %v1802 = vadd.f32 %v1602, %v1801
  %v1803 = vpop.f32.mrf.mxu0
  %1804 = vmatprep.mubr.f32.mxu0 0.0
  %1805 = vmatmul.mubr.f32.gmra.mxu0 %v1629
  %v1806 = vpop.f32.mrf.mxu0
  %v1807 = vadd.f32 %v1602, %v1806
  %v1808 = vpop.f32.mrf.mxu0
  %1809 = vmatprep.mubr.f32.mxu0 0.0
  %1810 = vmatmul.mubr.f32.gmra.mxu0 %v1632
  %v1811 = vpop.f32.mrf.mxu0
  %v1812 = vadd.f32 %v1602, %v1811
  %v1813 = vpop.f32.mrf.mxu0
  %1814 = vmatprep.mubr.f32.mxu0 0.0
  %1815 = vmatmul.mubr.f32.gmra.mxu0 %v1635
  %v1816 = vpop.f32.mrf.mxu0
  %v1817 = vadd.f32 %v1602, %v1816
  %v1818 = vpop.f32.mrf.mxu0
  %1819 = vmatprep.mubr.f32.mxu0 0.0
  %1820 = vmatmul.mubr.f32.gmra.mxu0 %v1638
  %v1821 = vpop.f32.mrf.mxu0
  %v1822 = vadd.f32 %v1602, %v1821
  %v1823 = vpop.f32.mrf.mxu0
  %1824 = vmatprep.mubr.f32.mxu0 0.0
  %1825 = vmatmul.mubr.f32.gmra.mxu0 %v1641
  %v1826 = vpop.f32.mrf.mxu0
  %v1827 = vadd.f32 %v1602, %v1826
  %v1828 = vpop.f32.mrf.mxu0
  %1829 = vmatprep.mubr.f32.mxu0 0.0
  %1830 = vmatmul.mubr.f32.gmra.mxu0 %v1644
  %v1831 = vpop.f32.mrf.mxu0
  %v1832 = vadd.f32 %v1602, %v1831
  %v1833 = vpop.f32.mrf.mxu0
  %1834 = vmatprep.mubr.f32.mxu0 0.0
  %1835 = vmatmul.mubr.f32.gmra.mxu0 %v1647
  %v1836 = vpop.f32.mrf.mxu0
  %v1837 = vadd.f32 %v1602, %v1836
  %v1838 = vpop.f32.mrf.mxu0
  %1839 = vmatprep.mubr.f32.mxu0 0.0
  %1840 = vmatmul.mubr.f32.gmra.mxu0 %v1650
  %v1841 = vpop.f32.mrf.mxu0
  %v1842 = vadd.f32 %v1602, %v1841
  %v1843 = vpop.f32.mrf.mxu0
  %1844 = vmatprep.mubr.f32.mxu0 0.0
  %1845 = vmatmul.mubr.f32.gmra.mxu0 %v1653
  %v1846 = vpop.f32.mrf.mxu0
  %v1847 = vadd.f32 %v1602, %v1846
  %v1848 = vpop.f32.mrf.mxu0
  %1849 = vmatprep.mubr.f32.mxu0 0.0
  %1850 = vmatmul.mubr.f32.gmra.mxu0 %v1656
  %v1851 = vpop.f32.mrf.mxu0
  %v1852 = vadd.f32 %v1602, %v1851
  %v1853 = vpop.f32.mrf.mxu0
  %1854 = vmatprep.mubr.f32.mxu0 0.0
  %1855 = vmatmul.mubr.f32.gmra.mxu0 %v1659
  %v1856 = vpop.f32.mrf.mxu0
  %v1857 = vadd.f32 %v1602, %v1856
  %v1858 = vpop.f32.mrf.mxu0
  %1859 = vmatprep.mubr.f32.mxu0 0.0
  %1860 = vmatmul.mubr.f32.gmra.mxu0 %v1662
  %v1861 = vpop.f32.mrf.mxu0
  %v1862 = vadd.f32 %v1602, %v1861
  %v1863 = vpop.f32.mrf.mxu0
  %1864 = vmatprep.mubr.f32.mxu0 0.0
  %1865 = vmatmul.mubr.f32.gmra.mxu0 %v1665
  %v1866 = vpop.f32.mrf.mxu0
  %v1867 = vadd.f32 %v1602, %v1866
  %v1868 = vpop.f32.mrf.mxu0
  %1869 = vmatprep.mubr.f32.mxu0 0.0
  %1870 = vmatmul.mubr.f32.gmra.mxu0 %v1668
  %v1871 = vpop.f32.mrf.mxu0
  %v1872 = vadd.f32 %v1602, %v1871
  %v1873 = vpop.f32.mrf.mxu0
  %1874 = vmatprep.mubr.f32.mxu0 0.0
  %1875 = vmatmul.mubr.f32.gmra.mxu0 %v1671
  %v1876 = vpop.f32.mrf.mxu0
  %v1877 = vadd.f32 %v1602, %v1876
  %v1878 = vpop.f32.mrf.mxu0
  %1879 = vmatprep.mubr.f32.mxu0 0.0
  %1880 = vmatmul.mubr.f32.gmra.mxu0 %v1674
  %v1881 = vpop.f32.mrf.mxu0
  %v1882 = vadd.f32 %v1602, %v1881
  %v1883 = vpop.f32.mrf.mxu0
  %1884 = vmatprep.mubr.f32.mxu0 0.0
  %1885 = vmatmul.mubr.f32.gmra.mxu0 %v1677
  %v1886 = vpop.f32.mrf.mxu0
  %v1887 = vadd.f32 %v1602, %v1886
  %v1888 = vpop.f32.mrf.mxu0
  %1889 = vmatprep.mubr.f32.mxu0 0.0
  %1890 = vmatmul.mubr.f32.gmra.mxu0 %v1680
  %v1891 = vpop.f32.mrf.mxu0
  %v1892 = vadd.f32 %v1602, %v1891
  %v1893 = vpop.f32.mrf.mxu0
  %1894 = vmatprep.mubr.f32.mxu0 0.0
  %1895 = vmatmul.mubr.f32.gmra.mxu0 %v1683
  %v1896 = vpop.f32.mrf.mxu0
  %v1897 = vadd.f32 %v1602, %v1896
  %v1898 = vpop.f32.mrf.mxu0
  %1899 = vmatprep.mubr.f32.mxu0 0.0
  %1900 = vmatmul.mubr.f32.gmra.mxu0 %v1686
  %v1901 = vpop.f32.mrf.mxu0
  %v1902 = vadd.f32 %v1602, %v1901
  %v1903 = vpop.f32.mrf.mxu0
  %1904 = vmatprep.mubr.f32.mxu0 0.0
  %1905 = vmatmul.mubr.f32.gmra.mxu0 %v1689
  %v1906 = vpop.f32.mrf.mxu0
  %v1907 = vadd.f32 %v1602, %v1906
  %v1908 = vpop.f32.mrf.mxu0
  %1909 = vmatprep.mubr.f32.mxu0 0.0
  %1910 = vmatmul.mubr.f32.gmra.mxu0 %v1692
  %v1911 = vpop.f32.mrf.mxu0
  %v1912 = vadd.f32 %v1602, %v1911
  %v1913 = vpop.f32.mrf.mxu0
  %1914 = vmatprep.mubr.f32.mxu0 0.0
  %1915 = vmatmul.mubr.f32.gmra.mxu0 %v1695
  %v1916 = vpop.f32.mrf.mxu0
  %v1917 = vadd.f32 %v1602, %v1916
  %v1918 = vpop.f32.mrf.mxu0
  %1919 = vmatprep.mubr.f32.mxu0 0.0
  %1920 = vmatmul.mubr.f32.gmra.mxu0 %v1698
  %v1921 = vpop.f32.mrf.mxu0
  %v1922 = vadd.f32 %v1602, %v1921
  %v1923 = vpop.f32.mrf.mxu0
  %1924 = vdwg.mxu0
  %v1925 = vld [vmem:[%s13] sm:$0xff]
  %v1926 = vld [vmem:[%s13 + $0x8] sm:$0xff]
  %v1927 = vld [vmem:[%s13 + $0x10] sm:$0xff]
  %v1928 = vld [vmem:[%s13 + $0x18] sm:$0xff]
  %v1929 = vld [vmem:[%s14] sm:$0x1]
  %v1931 = vlaneseq
  %v1932 = vshrl.u32 %v1931, 7
  %v1933 = vsub.s32 0, %v1932
  %v1934 = vrot.slane %v1929, %v1933
  %v1937 = vsel %vm434, %v1767, 0
  %v1940 = vsel %vm434, %v1772, 0
  %v1943 = vsel %vm434, %v1777, 0
  %v1946 = vsel %vm434, %v1782, 0
  %v1949 = vsel %vm434, %v1787, 0
  %v1952 = vsel %vm434, %v1792, 0
  %v1955 = vsel %vm434, %v1797, 0
  %v1958 = vsel %vm434, %v1802, 0
  %v1961 = vsel %vm434, %v1807, 0
  %v1964 = vsel %vm434, %v1812, 0
  %v1967 = vsel %vm434, %v1817, 0
  %v1970 = vsel %vm434, %v1822, 0
  %v1973 = vsel %vm434, %v1827, 0
  %v1976 = vsel %vm434, %v1832, 0
  %v1979 = vsel %vm434, %v1837, 0
  %v1982 = vsel %vm434, %v1842, 0
  %v1985 = vsel %vm434, %v1847, 0
  %v1988 = vsel %vm434, %v1852, 0
  %v1991 = vsel %vm434, %v1857, 0
  %v1994 = vsel %vm434, %v1862, 0
  %v1997 = vsel %vm434, %v1867, 0
  %v2000 = vsel %vm434, %v1872, 0
  %v2003 = vsel %vm434, %v1877, 0
  %v2006 = vsel %vm434, %v1882, 0
  %v2009 = vsel %vm434, %v1887, 0
  %v2012 = vsel %vm434, %v1892, 0
  %v2015 = vsel %vm434, %v1897, 0
  %v2018 = vsel %vm434, %v1902, 0
  %v2021 = vsel %vm434, %v1907, 0
  %v2024 = vsel %vm434, %v1912, 0
  %v2027 = vsel %vm434, %v1917, 0
  %v2030 = vsel %vm434, %v1922, 0
  %2032 = vmatprep.subr.mxu0 0.0
  %2033 = vmatpush1.msra.mxu0 0.0
  %2034 = vmatprep.subr.mxu0 0.0
  %2035 = vmatpush1.msra.mxu0 0.0
  %2036 = vmatprep.subr.mxu0 0.0
  %2037 = vmatpush1.msra.mxu0 0.0
  %2038 = vmatprep.subr.mxu0 0.0
  %2039 = vmatpush1.msra.mxu0 0.0
  %2040 = vmatprep.subr.mxu0 0.0
  %2041 = vmatpush1.msra.mxu0 0.0
  %2042 = vmatprep.subr.mxu0 0.0
  %2043 = vmatpush1.msra.mxu0 0.0
  %2044 = vmatprep.subr.mxu0 0.0
  %2045 = vmatpush1.msra.mxu0 0.0
  %2046 = vmatprep.subr.mxu0 0.0
  %2047 = vmatpush1.msra.mxu0 0.0
  %2048 = vmatprep.subr.mxu0 0.0
  %2049 = vmatpush1.msra.mxu0 0.0
  %2050 = vmatprep.subr.mxu0 0.0
  %2051 = vmatpush1.msra.mxu0 0.0
  %2052 = vmatprep.subr.mxu0 0.0
  %2053 = vmatpush1.msra.mxu0 0.0
  %2054 = vmatprep.subr.mxu0 0.0
  %2055 = vmatpush1.msra.mxu0 0.0
  %2056 = vmatprep.subr.mxu0 0.0
  %2057 = vmatpush1.msra.mxu0 %v1928
  %2058 = vmatprep.subr.mxu0 0.0
  %2059 = vmatpush1.msra.mxu0 %v1927
  %2060 = vmatprep.subr.mxu0 0.0
  %2061 = vmatpush1.msra.mxu0 %v1926
  %2062 = vmatprep.subr.mxu0 0.0
  %2063 = vmatpush1.msra.mxu0 %v1925
  %2064 = vmatprep.subr.mxu0 0.0
  %2065 = vmatpush2.msra.mxu0 0.0
  %2066 = vmatprep.subr.mxu0 0.0
  %2067 = vmatpush2.msra.mxu0 0.0
  %2068 = vmatprep.subr.mxu0 0.0
  %2069 = vmatpush2.msra.mxu0 0.0
  %2070 = vmatprep.subr.mxu0 0.0
  %2071 = vmatpush2.msra.mxu0 0.0
  %2072 = vmatprep.subr.mxu0 0.0
  %2073 = vmatpush2.msra.mxu0 0.0
  %2074 = vmatprep.subr.mxu0 0.0
  %2075 = vmatpush2.msra.mxu0 0.0
  %2076 = vmatprep.subr.mxu0 0.0
  %2077 = vmatpush2.msra.mxu0 0.0
  %2078 = vmatprep.subr.mxu0 0.0
  %2079 = vmatpush2.msra.mxu0 0.0
  %2080 = vmatprep.subr.mxu0 0.0
  %2081 = vmatpush2.msra.mxu0 0.0
  %2082 = vmatprep.subr.mxu0 0.0
  %2083 = vmatpush2.msra.mxu0 0.0
  %2084 = vmatprep.subr.mxu0 0.0
  %2085 = vmatpush2.msra.mxu0 0.0
  %2086 = vmatprep.subr.mxu0 0.0
  %2087 = vmatpush2.msra.mxu0 0.0
  %2088 = vmatprep.subr.mxu0 0.0
  %2089 = vmatpush2.msra.mxu0 0.0
  %2090 = vmatprep.subr.mxu0 0.0
  %2091 = vmatpush2.msra.mxu0 0.0
  %2092 = vmatprep.subr.mxu0 0.0
  %2093 = vmatpush2.msra.mxu0 0.0
  %2094 = vmatprep.subr.mxu0 0.0
  %2095 = vmatpush2.msra.mxu0 0.0
  %2096 = vmatprep.mubr.f32.mxu0 0.0
  %2097 = vmatmul.mubr.f32.gmra.mxu0 %v1937
  %v2098 = vpop.f32.mrf.mxu0
  %v2099 = vadd.f32 %v1934, %v2098
  %v2100 = vpop.f32.mrf.mxu0
  %2101 = vmatprep.mubr.f32.mxu0 0.0
  %2102 = vmatmul.mubr.f32.gmra.mxu0 %v1940
  %v2103 = vpop.f32.mrf.mxu0
  %v2104 = vadd.f32 %v1934, %v2103
  %v2105 = vpop.f32.mrf.mxu0
  %2106 = vmatprep.mubr.f32.mxu0 0.0
  %2107 = vmatmul.mubr.f32.gmra.mxu0 %v1943
  %v2108 = vpop.f32.mrf.mxu0
  %v2109 = vadd.f32 %v1934, %v2108
  %v2110 = vpop.f32.mrf.mxu0
  %2111 = vmatprep.mubr.f32.mxu0 0.0
  %2112 = vmatmul.mubr.f32.gmra.mxu0 %v1946
  %v2113 = vpop.f32.mrf.mxu0
  %v2114 = vadd.f32 %v1934, %v2113
  %v2115 = vpop.f32.mrf.mxu0
  %2116 = vmatprep.mubr.f32.mxu0 0.0
  %2117 = vmatmul.mubr.f32.gmra.mxu0 %v1949
  %v2118 = vpop.f32.mrf.mxu0
  %v2119 = vadd.f32 %v1934, %v2118
  %v2120 = vpop.f32.mrf.mxu0
  %2121 = vmatprep.mubr.f32.mxu0 0.0
  %2122 = vmatmul.mubr.f32.gmra.mxu0 %v1952
  %v2123 = vpop.f32.mrf.mxu0
  %v2124 = vadd.f32 %v1934, %v2123
  %v2125 = vpop.f32.mrf.mxu0
  %2126 = vmatprep.mubr.f32.mxu0 0.0
  %2127 = vmatmul.mubr.f32.gmra.mxu0 %v1955
  %v2128 = vpop.f32.mrf.mxu0
  %v2129 = vadd.f32 %v1934, %v2128
  %v2130 = vpop.f32.mrf.mxu0
  %2131 = vmatprep.mubr.f32.mxu0 0.0
  %2132 = vmatmul.mubr.f32.gmra.mxu0 %v1958
  %v2133 = vpop.f32.mrf.mxu0
  %v2134 = vadd.f32 %v1934, %v2133
  %v2135 = vpop.f32.mrf.mxu0
  %2136 = vmatprep.mubr.f32.mxu0 0.0
  %2137 = vmatmul.mubr.f32.gmra.mxu0 %v1961
  %v2138 = vpop.f32.mrf.mxu0
  %v2139 = vadd.f32 %v1934, %v2138
  %v2140 = vpop.f32.mrf.mxu0
  %2141 = vmatprep.mubr.f32.mxu0 0.0
  %2142 = vmatmul.mubr.f32.gmra.mxu0 %v1964
  %v2143 = vpop.f32.mrf.mxu0
  %v2144 = vadd.f32 %v1934, %v2143
  %v2145 = vpop.f32.mrf.mxu0
  %2146 = vmatprep.mubr.f32.mxu0 0.0
  %2147 = vmatmul.mubr.f32.gmra.mxu0 %v1967
  %v2148 = vpop.f32.mrf.mxu0
  %v2149 = vadd.f32 %v1934, %v2148
  %v2150 = vpop.f32.mrf.mxu0
  %2151 = vmatprep.mubr.f32.mxu0 0.0
  %2152 = vmatmul.mubr.f32.gmra.mxu0 %v1970
  %v2153 = vpop.f32.mrf.mxu0
  %v2154 = vadd.f32 %v1934, %v2153
  %v2155 = vpop.f32.mrf.mxu0
  %2156 = vmatprep.mubr.f32.mxu0 0.0
  %2157 = vmatmul.mubr.f32.gmra.mxu0 %v1973
  %v2158 = vpop.f32.mrf.mxu0
  %v2159 = vadd.f32 %v1934, %v2158
  %v2160 = vpop.f32.mrf.mxu0
  %2161 = vmatprep.mubr.f32.mxu0 0.0
  %2162 = vmatmul.mubr.f32.gmra.mxu0 %v1976
  %v2163 = vpop.f32.mrf.mxu0
  %v2164 = vadd.f32 %v1934, %v2163
  %v2165 = vpop.f32.mrf.mxu0
  %2166 = vmatprep.mubr.f32.mxu0 0.0
  %2167 = vmatmul.mubr.f32.gmra.mxu0 %v1979
  %v2168 = vpop.f32.mrf.mxu0
  %v2169 = vadd.f32 %v1934, %v2168
  %v2170 = vpop.f32.mrf.mxu0
  %2171 = vmatprep.mubr.f32.mxu0 0.0
  %2172 = vmatmul.mubr.f32.gmra.mxu0 %v1982
  %v2173 = vpop.f32.mrf.mxu0
  %v2174 = vadd.f32 %v1934, %v2173
  %v2175 = vpop.f32.mrf.mxu0
  %2176 = vmatprep.mubr.f32.mxu0 0.0
  %2177 = vmatmul.mubr.f32.gmra.mxu0 %v1985
  %v2178 = vpop.f32.mrf.mxu0
  %v2179 = vadd.f32 %v1934, %v2178
  %v2180 = vpop.f32.mrf.mxu0
  %2181 = vmatprep.mubr.f32.mxu0 0.0
  %2182 = vmatmul.mubr.f32.gmra.mxu0 %v1988
  %v2183 = vpop.f32.mrf.mxu0
  %v2184 = vadd.f32 %v1934, %v2183
  %v2185 = vpop.f32.mrf.mxu0
  %2186 = vmatprep.mubr.f32.mxu0 0.0
  %2187 = vmatmul.mubr.f32.gmra.mxu0 %v1991
  %v2188 = vpop.f32.mrf.mxu0
  %v2189 = vadd.f32 %v1934, %v2188
  %v2190 = vpop.f32.mrf.mxu0
  %2191 = vmatprep.mubr.f32.mxu0 0.0
  %2192 = vmatmul.mubr.f32.gmra.mxu0 %v1994
  %v2193 = vpop.f32.mrf.mxu0
  %v2194 = vadd.f32 %v1934, %v2193
  %v2195 = vpop.f32.mrf.mxu0
  %2196 = vmatprep.mubr.f32.mxu0 0.0
  %2197 = vmatmul.mubr.f32.gmra.mxu0 %v1997
  %v2198 = vpop.f32.mrf.mxu0
  %v2199 = vadd.f32 %v1934, %v2198
  %v2200 = vpop.f32.mrf.mxu0
  %2201 = vmatprep.mubr.f32.mxu0 0.0
  %2202 = vmatmul.mubr.f32.gmra.mxu0 %v2000
  %v2203 = vpop.f32.mrf.mxu0
  %v2204 = vadd.f32 %v1934, %v2203
  %v2205 = vpop.f32.mrf.mxu0
  %2206 = vmatprep.mubr.f32.mxu0 0.0
  %2207 = vmatmul.mubr.f32.gmra.mxu0 %v2003
  %v2208 = vpop.f32.mrf.mxu0
  %v2209 = vadd.f32 %v1934, %v2208
  %v2210 = vpop.f32.mrf.mxu0
  %2211 = vmatprep.mubr.f32.mxu0 0.0
  %2212 = vmatmul.mubr.f32.gmra.mxu0 %v2006
  %v2213 = vpop.f32.mrf.mxu0
  %v2214 = vadd.f32 %v1934, %v2213
  %v2215 = vpop.f32.mrf.mxu0
  %2216 = vmatprep.mubr.f32.mxu0 0.0
  %2217 = vmatmul.mubr.f32.gmra.mxu0 %v2009
  %v2218 = vpop.f32.mrf.mxu0
  %v2219 = vadd.f32 %v1934, %v2218
  %v2220 = vpop.f32.mrf.mxu0
  %2221 = vmatprep.mubr.f32.mxu0 0.0
  %2222 = vmatmul.mubr.f32.gmra.mxu0 %v2012
  %v2223 = vpop.f32.mrf.mxu0
  %v2224 = vadd.f32 %v1934, %v2223
  %v2225 = vpop.f32.mrf.mxu0
  %2226 = vmatprep.mubr.f32.mxu0 0.0
  %2227 = vmatmul.mubr.f32.gmra.mxu0 %v2015
  %v2228 = vpop.f32.mrf.mxu0
  %v2229 = vadd.f32 %v1934, %v2228
  %v2230 = vpop.f32.mrf.mxu0
  %2231 = vmatprep.mubr.f32.mxu0 0.0
  %2232 = vmatmul.mubr.f32.gmra.mxu0 %v2018
  %v2233 = vpop.f32.mrf.mxu0
  %v2234 = vadd.f32 %v1934, %v2233
  %v2235 = vpop.f32.mrf.mxu0
  %2236 = vmatprep.mubr.f32.mxu0 0.0
  %2237 = vmatmul.mubr.f32.gmra.mxu0 %v2021
  %v2238 = vpop.f32.mrf.mxu0
  %v2239 = vadd.f32 %v1934, %v2238
  %v2240 = vpop.f32.mrf.mxu0
  %2241 = vmatprep.mubr.f32.mxu0 0.0
  %2242 = vmatmul.mubr.f32.gmra.mxu0 %v2024
  %v2243 = vpop.f32.mrf.mxu0
  %v2244 = vadd.f32 %v1934, %v2243
  %v2245 = vpop.f32.mrf.mxu0
  %2246 = vmatprep.mubr.f32.mxu0 0.0
  %2247 = vmatmul.mubr.f32.gmra.mxu0 %v2027
  %v2248 = vpop.f32.mrf.mxu0
  %v2249 = vadd.f32 %v1934, %v2248
  %v2250 = vpop.f32.mrf.mxu0
  %2251 = vmatprep.mubr.f32.mxu0 0.0
  %2252 = vmatmul.mubr.f32.gmra.mxu0 %v2030
  %v2253 = vpop.f32.mrf.mxu0
  %v2254 = vadd.f32 %v1934, %v2253
  %v2255 = vpop.f32.mrf.mxu0
  %2256 = vdwg.mxu0
  %v2257 = vld [vmem:[%s15] sm:$0xff]
  %v2258 = vld [vmem:[%s15 + $0x8] sm:$0xff]
  %v2259 = vld [vmem:[%s15 + $0x10] sm:$0xff]
  %v2260 = vld [vmem:[%s15 + $0x18] sm:$0xff]
  %v2261 = vld [vmem:[%s16] sm:$0x1]
  %v2263 = vlaneseq
  %v2264 = vshrl.u32 %v2263, 7
  %v2265 = vsub.s32 0, %v2264
  %v2266 = vrot.slane %v2261, %v2265
  %v2269 = vsel %vm434, %v2099, 0
  %v2272 = vsel %vm434, %v2104, 0
  %v2275 = vsel %vm434, %v2109, 0
  %v2278 = vsel %vm434, %v2114, 0
  %v2281 = vsel %vm434, %v2119, 0
  %v2284 = vsel %vm434, %v2124, 0
  %v2287 = vsel %vm434, %v2129, 0
  %v2290 = vsel %vm434, %v2134, 0
  %v2293 = vsel %vm434, %v2139, 0
  %v2296 = vsel %vm434, %v2144, 0
  %v2299 = vsel %vm434, %v2149, 0
  %v2302 = vsel %vm434, %v2154, 0
  %v2305 = vsel %vm434, %v2159, 0
  %v2308 = vsel %vm434, %v2164, 0
  %v2311 = vsel %vm434, %v2169, 0
  %v2314 = vsel %vm434, %v2174, 0
  %v2317 = vsel %vm434, %v2179, 0
  %v2320 = vsel %vm434, %v2184, 0
  %v2323 = vsel %vm434, %v2189, 0
  %v2326 = vsel %vm434, %v2194, 0
  %v2329 = vsel %vm434, %v2199, 0
  %v2332 = vsel %vm434, %v2204, 0
  %v2335 = vsel %vm434, %v2209, 0
  %v2338 = vsel %vm434, %v2214, 0
  %v2341 = vsel %vm434, %v2219, 0
  %v2344 = vsel %vm434, %v2224, 0
  %v2347 = vsel %vm434, %v2229, 0
  %v2350 = vsel %vm434, %v2234, 0
  %v2353 = vsel %vm434, %v2239, 0
  %v2356 = vsel %vm434, %v2244, 0
  %v2359 = vsel %vm434, %v2249, 0
  %v2362 = vsel %vm434, %v2254, 0
  %2364 = vmatprep.subr.mxu0 0.0
  %2365 = vmatpush1.msra.mxu0 0.0
  %2366 = vmatprep.subr.mxu0 0.0
  %2367 = vmatpush1.msra.mxu0 0.0
  %2368 = vmatprep.subr.mxu0 0.0
  %2369 = vmatpush1.msra.mxu0 0.0
  %2370 = vmatprep.subr.mxu0 0.0
  %2371 = vmatpush1.msra.mxu0 0.0
  %2372 = vmatprep.subr.mxu0 0.0
  %2373 = vmatpush1.msra.mxu0 0.0
  %2374 = vmatprep.subr.mxu0 0.0
  %2375 = vmatpush1.msra.mxu0 0.0
  %2376 = vmatprep.subr.mxu0 0.0
  %2377 = vmatpush1.msra.mxu0 0.0
  %2378 = vmatprep.subr.mxu0 0.0
  %2379 = vmatpush1.msra.mxu0 0.0
  %2380 = vmatprep.subr.mxu0 0.0
  %2381 = vmatpush1.msra.mxu0 0.0
  %2382 = vmatprep.subr.mxu0 0.0
  %2383 = vmatpush1.msra.mxu0 0.0
  %2384 = vmatprep.subr.mxu0 0.0
  %2385 = vmatpush1.msra.mxu0 0.0
  %2386 = vmatprep.subr.mxu0 0.0
  %2387 = vmatpush1.msra.mxu0 0.0
  %2388 = vmatprep.subr.mxu0 0.0
  %2389 = vmatpush1.msra.mxu0 %v2260
  %2390 = vmatprep.subr.mxu0 0.0
  %2391 = vmatpush1.msra.mxu0 %v2259
  %2392 = vmatprep.subr.mxu0 0.0
  %2393 = vmatpush1.msra.mxu0 %v2258
  %2394 = vmatprep.subr.mxu0 0.0
  %2395 = vmatpush1.msra.mxu0 %v2257
  %2396 = vmatprep.subr.mxu0 0.0
  %2397 = vmatpush2.msra.mxu0 0.0
  %2398 = vmatprep.subr.mxu0 0.0
  %2399 = vmatpush2.msra.mxu0 0.0
  %2400 = vmatprep.subr.mxu0 0.0
  %2401 = vmatpush2.msra.mxu0 0.0
  %2402 = vmatprep.subr.mxu0 0.0
  %2403 = vmatpush2.msra.mxu0 0.0
  %2404 = vmatprep.subr.mxu0 0.0
  %2405 = vmatpush2.msra.mxu0 0.0
  %2406 = vmatprep.subr.mxu0 0.0
  %2407 = vmatpush2.msra.mxu0 0.0
  %2408 = vmatprep.subr.mxu0 0.0
  %2409 = vmatpush2.msra.mxu0 0.0
  %2410 = vmatprep.subr.mxu0 0.0
  %2411 = vmatpush2.msra.mxu0 0.0
  %2412 = vmatprep.subr.mxu0 0.0
  %2413 = vmatpush2.msra.mxu0 0.0
  %2414 = vmatprep.subr.mxu0 0.0
  %2415 = vmatpush2.msra.mxu0 0.0
  %2416 = vmatprep.subr.mxu0 0.0
  %2417 = vmatpush2.msra.mxu0 0.0
  %2418 = vmatprep.subr.mxu0 0.0
  %2419 = vmatpush2.msra.mxu0 0.0
  %2420 = vmatprep.subr.mxu0 0.0
  %2421 = vmatpush2.msra.mxu0 0.0
  %2422 = vmatprep.subr.mxu0 0.0
  %2423 = vmatpush2.msra.mxu0 0.0
  %2424 = vmatprep.subr.mxu0 0.0
  %2425 = vmatpush2.msra.mxu0 0.0
  %2426 = vmatprep.subr.mxu0 0.0
  %2427 = vmatpush2.msra.mxu0 0.0
  %2428 = vmatprep.mubr.f32.mxu0 0.0
  %2429 = vmatmul.mubr.f32.gmra.mxu0 %v2269
  %v2430 = vpop.f32.mrf.mxu0
  %v2431 = vadd.f32 %v2266, %v2430
  %v2432 = vpop.f32.mrf.mxu0
  %2433 = vmatprep.mubr.f32.mxu0 0.0
  %2434 = vmatmul.mubr.f32.gmra.mxu0 %v2272
  %v2435 = vpop.f32.mrf.mxu0
  %v2436 = vadd.f32 %v2266, %v2435
  %v2437 = vpop.f32.mrf.mxu0
  %2438 = vmatprep.mubr.f32.mxu0 0.0
  %2439 = vmatmul.mubr.f32.gmra.mxu0 %v2275
  %v2440 = vpop.f32.mrf.mxu0
  %v2441 = vadd.f32 %v2266, %v2440
  %v2442 = vpop.f32.mrf.mxu0
  %2443 = vmatprep.mubr.f32.mxu0 0.0
  %2444 = vmatmul.mubr.f32.gmra.mxu0 %v2278
  %v2445 = vpop.f32.mrf.mxu0
  %v2446 = vadd.f32 %v2266, %v2445
  %v2447 = vpop.f32.mrf.mxu0
  %2448 = vmatprep.mubr.f32.mxu0 0.0
  %2449 = vmatmul.mubr.f32.gmra.mxu0 %v2281
  %v2450 = vpop.f32.mrf.mxu0
  %v2451 = vadd.f32 %v2266, %v2450
  %v2452 = vpop.f32.mrf.mxu0
  %2453 = vmatprep.mubr.f32.mxu0 0.0
  %2454 = vmatmul.mubr.f32.gmra.mxu0 %v2284
  %v2455 = vpop.f32.mrf.mxu0
  %v2456 = vadd.f32 %v2266, %v2455
  %v2457 = vpop.f32.mrf.mxu0
  %2458 = vmatprep.mubr.f32.mxu0 0.0
  %2459 = vmatmul.mubr.f32.gmra.mxu0 %v2287
  %v2460 = vpop.f32.mrf.mxu0
  %v2461 = vadd.f32 %v2266, %v2460
  %v2462 = vpop.f32.mrf.mxu0
  %2463 = vmatprep.mubr.f32.mxu0 0.0
  %2464 = vmatmul.mubr.f32.gmra.mxu0 %v2290
  %v2465 = vpop.f32.mrf.mxu0
  %v2466 = vadd.f32 %v2266, %v2465
  %v2467 = vpop.f32.mrf.mxu0
  %2468 = vmatprep.mubr.f32.mxu0 0.0
  %2469 = vmatmul.mubr.f32.gmra.mxu0 %v2293
  %v2470 = vpop.f32.mrf.mxu0
  %v2471 = vadd.f32 %v2266, %v2470
  %v2472 = vpop.f32.mrf.mxu0
  %2473 = vmatprep.mubr.f32.mxu0 0.0
  %2474 = vmatmul.mubr.f32.gmra.mxu0 %v2296
  %v2475 = vpop.f32.mrf.mxu0
  %v2476 = vadd.f32 %v2266, %v2475
  %v2477 = vpop.f32.mrf.mxu0
  %2478 = vmatprep.mubr.f32.mxu0 0.0
  %2479 = vmatmul.mubr.f32.gmra.mxu0 %v2299
  %v2480 = vpop.f32.mrf.mxu0
  %v2481 = vadd.f32 %v2266, %v2480
  %v2482 = vpop.f32.mrf.mxu0
  %2483 = vmatprep.mubr.f32.mxu0 0.0
  %2484 = vmatmul.mubr.f32.gmra.mxu0 %v2302
  %v2485 = vpop.f32.mrf.mxu0
  %v2486 = vadd.f32 %v2266, %v2485
  %v2487 = vpop.f32.mrf.mxu0
  %2488 = vmatprep.mubr.f32.mxu0 0.0
  %2489 = vmatmul.mubr.f32.gmra.mxu0 %v2305
  %v2490 = vpop.f32.mrf.mxu0
  %v2491 = vadd.f32 %v2266, %v2490
  %v2492 = vpop.f32.mrf.mxu0
  %2493 = vmatprep.mubr.f32.mxu0 0.0
  %2494 = vmatmul.mubr.f32.gmra.mxu0 %v2308
  %v2495 = vpop.f32.mrf.mxu0
  %v2496 = vadd.f32 %v2266, %v2495
  %v2497 = vpop.f32.mrf.mxu0
  %2498 = vmatprep.mubr.f32.mxu0 0.0
  %2499 = vmatmul.mubr.f32.gmra.mxu0 %v2311
  %v2500 = vpop.f32.mrf.mxu0
  %v2501 = vadd.f32 %v2266, %v2500
  %v2502 = vpop.f32.mrf.mxu0
  %2503 = vmatprep.mubr.f32.mxu0 0.0
  %2504 = vmatmul.mubr.f32.gmra.mxu0 %v2314
  %v2505 = vpop.f32.mrf.mxu0
  %v2506 = vadd.f32 %v2266, %v2505
  %v2507 = vpop.f32.mrf.mxu0
  %2508 = vmatprep.mubr.f32.mxu0 0.0
  %2509 = vmatmul.mubr.f32.gmra.mxu0 %v2317
  %v2510 = vpop.f32.mrf.mxu0
  %v2511 = vadd.f32 %v2266, %v2510
  %v2512 = vpop.f32.mrf.mxu0
  %2513 = vmatprep.mubr.f32.mxu0 0.0
  %2514 = vmatmul.mubr.f32.gmra.mxu0 %v2320
  %v2515 = vpop.f32.mrf.mxu0
  %v2516 = vadd.f32 %v2266, %v2515
  %v2517 = vpop.f32.mrf.mxu0
  %2518 = vmatprep.mubr.f32.mxu0 0.0
  %2519 = vmatmul.mubr.f32.gmra.mxu0 %v2323
  %v2520 = vpop.f32.mrf.mxu0
  %v2521 = vadd.f32 %v2266, %v2520
  %v2522 = vpop.f32.mrf.mxu0
  %2523 = vmatprep.mubr.f32.mxu0 0.0
  %2524 = vmatmul.mubr.f32.gmra.mxu0 %v2326
  %v2525 = vpop.f32.mrf.mxu0
  %v2526 = vadd.f32 %v2266, %v2525
  %v2527 = vpop.f32.mrf.mxu0
  %2528 = vmatprep.mubr.f32.mxu0 0.0
  %2529 = vmatmul.mubr.f32.gmra.mxu0 %v2329
  %v2530 = vpop.f32.mrf.mxu0
  %v2531 = vadd.f32 %v2266, %v2530
  %v2532 = vpop.f32.mrf.mxu0
  %2533 = vmatprep.mubr.f32.mxu0 0.0
  %2534 = vmatmul.mubr.f32.gmra.mxu0 %v2332
  %v2535 = vpop.f32.mrf.mxu0
  %v2536 = vadd.f32 %v2266, %v2535
  %v2537 = vpop.f32.mrf.mxu0
  %2538 = vmatprep.mubr.f32.mxu0 0.0
  %2539 = vmatmul.mubr.f32.gmra.mxu0 %v2335
  %v2540 = vpop.f32.mrf.mxu0
  %v2541 = vadd.f32 %v2266, %v2540
  %v2542 = vpop.f32.mrf.mxu0
  %2543 = vmatprep.mubr.f32.mxu0 0.0
  %2544 = vmatmul.mubr.f32.gmra.mxu0 %v2338
  %v2545 = vpop.f32.mrf.mxu0
  %v2546 = vadd.f32 %v2266, %v2545
  %v2547 = vpop.f32.mrf.mxu0
  %2548 = vmatprep.mubr.f32.mxu0 0.0
  %2549 = vmatmul.mubr.f32.gmra.mxu0 %v2341
  %v2550 = vpop.f32.mrf.mxu0
  %v2551 = vadd.f32 %v2266, %v2550
  %v2552 = vpop.f32.mrf.mxu0
  %2553 = vmatprep.mubr.f32.mxu0 0.0
  %2554 = vmatmul.mubr.f32.gmra.mxu0 %v2344
  %v2555 = vpop.f32.mrf.mxu0
  %v2556 = vadd.f32 %v2266, %v2555
  %v2557 = vpop.f32.mrf.mxu0
  %2558 = vmatprep.mubr.f32.mxu0 0.0
  %2559 = vmatmul.mubr.f32.gmra.mxu0 %v2347
  %v2560 = vpop.f32.mrf.mxu0
  %v2561 = vadd.f32 %v2266, %v2560
  %v2562 = vpop.f32.mrf.mxu0
  %2563 = vmatprep.mubr.f32.mxu0 0.0
  %2564 = vmatmul.mubr.f32.gmra.mxu0 %v2350
  %v2565 = vpop.f32.mrf.mxu0
  %v2566 = vadd.f32 %v2266, %v2565
  %v2567 = vpop.f32.mrf.mxu0
  %2568 = vmatprep.mubr.f32.mxu0 0.0
  %2569 = vmatmul.mubr.f32.gmra.mxu0 %v2353
  %v2570 = vpop.f32.mrf.mxu0
  %v2571 = vadd.f32 %v2266, %v2570
  %v2572 = vpop.f32.mrf.mxu0
  %2573 = vmatprep.mubr.f32.mxu0 0.0
  %2574 = vmatmul.mubr.f32.gmra.mxu0 %v2356
  %v2575 = vpop.f32.mrf.mxu0
  %v2576 = vadd.f32 %v2266, %v2575
  %v2577 = vpop.f32.mrf.mxu0
  %2578 = vmatprep.mubr.f32.mxu0 0.0
  %2579 = vmatmul.mubr.f32.gmra.mxu0 %v2359
  %v2580 = vpop.f32.mrf.mxu0
  %v2581 = vadd.f32 %v2266, %v2580
  %v2582 = vpop.f32.mrf.mxu0
  %2583 = vmatprep.mubr.f32.mxu0 0.0
  %2584 = vmatmul.mubr.f32.gmra.mxu0 %v2362
  %v2585 = vpop.f32.mrf.mxu0
  %v2586 = vadd.f32 %v2266, %v2585
  %v2587 = vpop.f32.mrf.mxu0
  %2588 = vdwg.mxu0
  %2589 = vst.msk [vmem:[%s17] sm:$0xff] %vm434, %v2431
  %2590 = vst.msk [vmem:[%s17 + $0x8] sm:$0xff] %vm434, %v2436
  %2591 = vst.msk [vmem:[%s17 + $0x10] sm:$0xff] %vm434, %v2441
  %2592 = vst.msk [vmem:[%s17 + $0x18] sm:$0xff] %vm434, %v2446
  %2593 = vst.msk [vmem:[%s17 + $0x20] sm:$0xff] %vm434, %v2451
  %2594 = vst.msk [vmem:[%s17 + $0x28] sm:$0xff] %vm434, %v2456
  %2595 = vst.msk [vmem:[%s17 + $0x30] sm:$0xff] %vm434, %v2461
  %2596 = vst.msk [vmem:[%s17 + $0x38] sm:$0xff] %vm434, %v2466
  %2597 = vst.msk [vmem:[%s17 + $0x40] sm:$0xff] %vm434, %v2471
  %2598 = vst.msk [vmem:[%s17 + $0x48] sm:$0xff] %vm434, %v2476
  %2599 = vst.msk [vmem:[%s17 + $0x50] sm:$0xff] %vm434, %v2481
  %2600 = vst.msk [vmem:[%s17 + $0x58] sm:$0xff] %vm434, %v2486
  %2601 = vst.msk [vmem:[%s17 + $0x60] sm:$0xff] %vm434, %v2491
  %2602 = vst.msk [vmem:[%s17 + $0x68] sm:$0xff] %vm434, %v2496
  %2603 = vst.msk [vmem:[%s17 + $0x70] sm:$0xff] %vm434, %v2501
  %2604 = vst.msk [vmem:[%s17 + $0x78] sm:$0xff] %vm434, %v2506
  %2605 = vst.msk [vmem:[%s17 + $0x80] sm:$0xff] %vm434, %v2511
  %2606 = vst.msk [vmem:[%s17 + $0x88] sm:$0xff] %vm434, %v2516
  %2607 = vst.msk [vmem:[%s17 + $0x90] sm:$0xff] %vm434, %v2521
  %2608 = vst.msk [vmem:[%s17 + $0x98] sm:$0xff] %vm434, %v2526
  %2609 = vst.msk [vmem:[%s17 + $0xa0] sm:$0xff] %vm434, %v2531
  %2610 = vst.msk [vmem:[%s17 + $0xa8] sm:$0xff] %vm434, %v2536
  %2611 = vst.msk [vmem:[%s17 + $0xb0] sm:$0xff] %vm434, %v2541
  %2612 = vst.msk [vmem:[%s17 + $0xb8] sm:$0xff] %vm434, %v2546
  %2613 = vst.msk [vmem:[%s17 + $0xc0] sm:$0xff] %vm434, %v2551
  %2614 = vst.msk [vmem:[%s17 + $0xc8] sm:$0xff] %vm434, %v2556
  %2615 = vst.msk [vmem:[%s17 + $0xd0] sm:$0xff] %vm434, %v2561
  %2616 = vst.msk [vmem:[%s17 + $0xd8] sm:$0xff] %vm434, %v2566
  %2617 = vst.msk [vmem:[%s17 + $0xe0] sm:$0xff] %vm434, %v2571
  %2618 = vst.msk [vmem:[%s17 + $0xe8] sm:$0xff] %vm434, %v2576
  %2619 = vst.msk [vmem:[%s17 + $0xf0] sm:$0xff] %vm434, %v2581
  %2620 = vst.msk [vmem:[%s17 + $0xf8] sm:$0xff] %vm434, %v2586
  // Predicated region
  $region70: #{qt_hypernet_forward.1} parent=0 // pred_check
    _
  $region71: #{qt_hypernet_forward.1} parent=0 // pred_check_branch
    %2622 = sbr.rel (0) target = $region73
  $region72: #{qt_hypernet_forward.1} parent=0 // pred_region
    _
  $region73: #{qt_hypernet_forward.1} parent=0 // pred_fallthru
    _
  // Predicated region
  $region74: #{qt_hypernet_forward.1} parent=0 // pred_check
    _
  $region75: #{qt_hypernet_forward.1} parent=0 // pred_check_branch
    %2624 = sbr.rel (0) target = $region77
  $region76: #{qt_hypernet_forward.1} parent=0 // pred_region
    _
  $region77: #{qt_hypernet_forward.1} parent=0 // pred_fallthru
    _

</llo_original>
